<compile_context>
chip_gen: v5e
topology: v5e:2x2
jax: 0.10.0
libtpu: 0.0.40
codegen_flags: <defaults>
</compile_context>

<pallas_src>
import functools

import jax
import jax.numpy as jnp
from jax.experimental import pallas as pl
from jax.experimental.pallas import tpu as pltpu


def _round_up(x, m):
    return ((x + m - 1) // m) * m


def _deepset_kernel(
    x_ref,          # (TB*N, D)   flattened batch tile
    ew1_ref,        # (D, Hp)
    eb1_ref,        # (1, Hp)
    wmid_ref,       # (Hp, 6*Hp)  = [enc_w2|enc_w3|enc_w4|dec_w1|dec_w2|dec_w3]
    bmid_ref,       # (1, 6*Hp)
    dw4_ref,        # (Hp, Op)
    db4_ref,        # (1, Op)
    o_ref,          # (TB, Op)
    *, n_set, hp,
):
    rows = x_ref.shape[0]          # TB * N
    tb = rows // n_set

    # ----- encoder layer 1: Linear -> ReLU  (MXU M-dim = TB*N rows)
    h = jnp.maximum(
        jnp.dot(x_ref[...], ew1_ref[...], preferred_element_type=jnp.float32)
        + eb1_ref[...], 0.0)

    # ----- encoder layers 2..4 (fused weight buffer, 128-aligned static slices)
    for i in range(3):
        w = wmid_ref[:, i * hp:(i + 1) * hp]
        b = bmid_ref[:, i * hp:(i + 1) * hp]
        h = jnp.dot(h, w, preferred_element_type=jnp.float32) + b
        if i < 2:                      # last encoder linear has no ReLU
            h = jnp.maximum(h, 0.0)

    # ----- mean over the set dimension, per batch element -> (TB, Hp)
    #       ((TB*N, Hp) -> (TB, N, Hp) is a clean sublane split; reduce on XLU)
    pooled = jnp.mean(h.reshape(tb, n_set, hp), axis=1)

    # ----- decoder layers 1..3: Linear -> ReLU (batched over TB rows)
    d = pooled
    for i in range(3, 6):
        w = wmid_ref[:, i * hp:(i + 1) * hp]
        b = bmid_ref[:, i * hp:(i + 1) * hp]
        d = jnp.maximum(
            jnp.dot(d, w, preferred_element_type=jnp.float32) + b, 0.0)

    # ----- decoder layer 4: Linear (no ReLU) -> lane-dense (TB, Op) slab
    o_ref[...] = (
        jnp.dot(d, dw4_ref[...], preferred_element_type=jnp.float32)
        + db4_ref[...])


def deepset_forward(x, params, num_outputs, dim_output, *, batch_tile=32):
    """x: (B, N, dim_input) float32. Returns (B, num_outputs, dim_output)."""
    B, N, dim_input = x.shape
    H = params["enc_w1"].shape[1]
    out_dim = num_outputs * dim_output

    # Lane-pad hidden and output feature dims to multiples of 128.
    Hp = _round_up(H, 128)
    Op = _round_up(out_dim, 128)

    def pad2(w, rows, cols):
        return jnp.pad(w, ((0, rows - w.shape[0]), (0, cols - w.shape[1])))

    ew1 = pad2(params["enc_w1"], dim_input, Hp)
    eb1 = pad2(params["enc_b1"], 1, Hp)
    wmid = jnp.concatenate([
        pad2(params["enc_w2"], Hp, Hp), pad2(params["enc_w3"], Hp, Hp),
        pad2(params["enc_w4"], Hp, Hp), pad2(params["dec_w1"], Hp, Hp),
        pad2(params["dec_w2"], Hp, Hp), pad2(params["dec_w3"], Hp, Hp),
    ], axis=1)
    bmid = jnp.concatenate([
        pad2(params["enc_b2"], 1, Hp), pad2(params["enc_b3"], 1, Hp),
        pad2(params["enc_b4"], 1, Hp), pad2(params["dec_b1"], 1, Hp),
        pad2(params["dec_b2"], 1, Hp), pad2(params["dec_b3"], 1, Hp),
    ], axis=1)
    dw4 = pad2(params["dec_w4"], Hp, Op)
    db4 = pad2(params["dec_b4"], 1, Op)

    # Batch tile: multiple of 8 so (TB*N, D) input and (TB, Op) output blocks
    # are sublane-aligned; pad B up to a multiple of TB (padding sliced off).
    TB = _round_up(max(1, min(batch_tile, B)), 8)
    Bp = _round_up(B, TB)
    if Bp != B:
        x = jnp.pad(x, ((0, Bp - B), (0, 0), (0, 0)))
    # Flatten in the wrapper (free, contiguous) so the kernel sees a 2-D tile.
    x_flat = x.reshape(Bp * N, dim_input)
    grid = (Bp // TB,)

    weight_args = (ew1, eb1, wmid, bmid, dw4, db4)

    in_specs = [pl.BlockSpec((TB * N, dim_input), lambda b: (b, 0))]
    # Whole-array, grid-invariant weight blocks (constant index -> no re-DMA).
    in_specs += [pl.BlockSpec(a.shape, lambda b: (0, 0)) for a in weight_args]

    kernel = functools.partial(_deepset_kernel, n_set=N, hp=Hp)

    out = pl.pallas_call(
        kernel,
        out_shape=jax.ShapeDtypeStruct((Bp, Op), jnp.float32),
        grid_spec=pltpu.PrefetchScalarGridSpec(
            num_scalar_prefetch=0,
            grid=grid,
            in_specs=in_specs,
            out_specs=pl.BlockSpec((TB, Op), lambda b: (b, 0)),
        ),
        compiler_params=pltpu.CompilerParams(
            dimension_semantics=("parallel",)),
    )(x_flat, *weight_args)

    # Strip batch + lane padding, then reshape like the PyTorch module.
    return out[:B, :out_dim].reshape(B, num_outputs, dim_output)


def init_params(key, dim_input, dim_hidden, num_outputs, dim_output):
    """Deterministic synthetic parameters. Weights stored as (in, out)."""
    sizes = [
        ("enc_w1", (dim_input, dim_hidden)), ("enc_b1", (1, dim_hidden)),
        ("enc_w2", (dim_hidden, dim_hidden)), ("enc_b2", (1, dim_hidden)),
        ("enc_w3", (dim_hidden, dim_hidden)), ("enc_b3", (1, dim_hidden)),
        ("enc_w4", (dim_hidden, dim_hidden)), ("enc_b4", (1, dim_hidden)),
        ("dec_w1", (dim_hidden, dim_hidden)), ("dec_b1", (1, dim_hidden)),
        ("dec_w2", (dim_hidden, dim_hidden)), ("dec_b2", (1, dim_hidden)),
        ("dec_w3", (dim_hidden, dim_hidden)), ("dec_b3", (1, dim_hidden)),
        ("dec_w4", (dim_hidden, num_outputs * dim_output)),
        ("dec_b4", (1, num_outputs * dim_output)),
    ]
    params = {}
    keys = jax.random.split(key, len(sizes))
    for k, (name, shape) in zip(keys, sizes):
        if "_w" in name:
            scale = 1.0 / jnp.sqrt(jnp.float32(shape[0]))   # ~Kaiming-ish fan_in
        else:
            scale = 0.05                                     # small biases
        params[name] = jax.random.normal(k, shape, jnp.float32) * scale
    return params


def deepset_reference(x, params, num_outputs, dim_output):
    """Pure-JAX reference of the PyTorch forward for a sanity check."""
    h = x
    h = jax.nn.relu(h @ params["enc_w1"] + params["enc_b1"])
    h = jax.nn.relu(h @ params["enc_w2"] + params["enc_b2"])
    h = jax.nn.relu(h @ params["enc_w3"] + params["enc_b3"])
    h = h @ params["enc_w4"] + params["enc_b4"]
    h = h.mean(axis=-2)
    d = jax.nn.relu(h @ params["dec_w1"] + params["dec_b1"])
    d = jax.nn.relu(d @ params["dec_w2"] + params["dec_b2"])
    d = jax.nn.relu(d @ params["dec_w3"] + params["dec_b3"])
    d = d @ params["dec_w4"] + params["dec_b4"]
    return d.reshape(-1, num_outputs, dim_output)


if __name__ == "__main__":
    # Small shapes consistent with the module (dim_hidden uses the module
    # default of 128, which is already lane-aligned).  B=64 with TB=32 gives a
    # 2-step "parallel" grid so v7x's 2 TensorCores both get work.
    B, N = 64, 8
    dim_input = 4
    dim_hidden = 128
    num_outputs = 4
    dim_output = 4

    key = jax.random.PRNGKey(0)
    kx, kp = jax.random.split(key)
    x = jax.random.normal(kx, (B, N, dim_input), jnp.float32)
    params = init_params(kp, dim_input, dim_hidden, num_outputs, dim_output)

    out = deepset_forward(x, params, num_outputs, dim_output, batch_tile=32)
    out = jax.block_until_ready(out)

    ref = deepset_reference(x, params, num_outputs, dim_output)
    assert out.shape == (B, num_outputs, dim_output), out.shape
    assert jnp.allclose(out, ref, atol=2e-4, rtol=2e-4), "mismatch vs reference"

    print("KERNEL_OK")
</pallas_src>

<mosaic_0001>
module attributes {stable_mosaic.version = 11 : i64} {
  func.func @_deepset_kernel(%arg0: i32, %arg1: memref<256x4xf32, #tpu.memory_space<vmem>>, %arg2: memref<4x128xf32, #tpu.memory_space<vmem>>, %arg3: memref<1x128xf32, #tpu.memory_space<vmem>>, %arg4: memref<128x768xf32, #tpu.memory_space<vmem>>, %arg5: memref<1x768xf32, #tpu.memory_space<vmem>>, %arg6: memref<128x128xf32, #tpu.memory_space<vmem>>, %arg7: memref<1x128xf32, #tpu.memory_space<vmem>>, %arg8: memref<32x128xf32, #tpu.memory_space<vmem>>) attributes {dimension_semantics = [#tpu.dimension_semantics<parallel>], iteration_bounds = array<i64: 2>, scalar_prefetch = 0 : i64, scratch_operands = 0 : i64, tpu.core_type = #tpu.core_type<tc>, window_params = [{transform_indices = @transform_0, window_bounds = array<i64: 256, 4>}, {pipeline_mode = #tpu.pipeline_mode<synchronous>, transform_indices = @transform_1, window_bounds = array<i64: 4, 128>}, {pipeline_mode = #tpu.pipeline_mode<synchronous>, transform_indices = @transform_2, window_bounds = array<i64: 1, 128>}, {pipeline_mode = #tpu.pipeline_mode<synchronous>, transform_indices = @transform_3, window_bounds = array<i64: 128, 768>}, {pipeline_mode = #tpu.pipeline_mode<synchronous>, transform_indices = @transform_4, window_bounds = array<i64: 1, 768>}, {pipeline_mode = #tpu.pipeline_mode<synchronous>, transform_indices = @transform_5, window_bounds = array<i64: 128, 128>}, {pipeline_mode = #tpu.pipeline_mode<synchronous>, transform_indices = @transform_6, window_bounds = array<i64: 1, 128>}, {transform_indices = @transform_7, window_bounds = array<i64: 32, 128>}]} {
    %c0 = arith.constant 0 : index
    %c0_0 = arith.constant 0 : index
    %0 = vector.load %arg1[%c0, %c0_0] : memref<256x4xf32, #tpu.memory_space<vmem>>, vector<256x4xf32>
    %c0_1 = arith.constant 0 : index
    %c0_2 = arith.constant 0 : index
    %1 = vector.load %arg2[%c0_1, %c0_2] : memref<4x128xf32, #tpu.memory_space<vmem>>, vector<4x128xf32>
    %cst = arith.constant dense<0.000000e+00> : vector<256x128xf32>
    %2 = tpu.matmul %0, %1, %cst {dimension_numbers = #tpu.dot_dimension_numbers<[1], [0], [0], [1], [0, 0, 1, 1], [], []>} : vector<256x4xf32>, vector<4x128xf32>, vector<256x128xf32> -> vector<256x128xf32>
    %c0_3 = arith.constant 0 : index
    %c0_4 = arith.constant 0 : index
    %3 = vector.load %arg3[%c0_3, %c0_4] : memref<1x128xf32, #tpu.memory_space<vmem>>, vector<1x128xf32>
    %4 = vector.broadcast %3 : vector<1x128xf32> to vector<256x128xf32>
    %5 = arith.addf %2, %4 : vector<256x128xf32>
    %cst_5 = arith.constant 0.000000e+00 : f32
    %6 = vector.broadcast %cst_5 : f32 to vector<256x128xf32>
    %7 = arith.maximumf %5, %6 : vector<256x128xf32>
    %c0_6 = arith.constant 0 : index
    %c0_7 = arith.constant 0 : index
    %8 = vector.load %arg4[%c0_6, %c0_7] : memref<128x768xf32, #tpu.memory_space<vmem>>, vector<128x128xf32>
    %c0_8 = arith.constant 0 : index
    %c0_9 = arith.constant 0 : index
    %9 = vector.load %arg5[%c0_8, %c0_9] : memref<1x768xf32, #tpu.memory_space<vmem>>, vector<1x128xf32>
    %cst_10 = arith.constant dense<0.000000e+00> : vector<256x128xf32>
    %10 = tpu.matmul %7, %8, %cst_10 {dimension_numbers = #tpu.dot_dimension_numbers<[1], [0], [0], [1], [0, 0, 1, 1], [], []>} : vector<256x128xf32>, vector<128x128xf32>, vector<256x128xf32> -> vector<256x128xf32>
    %11 = vector.broadcast %9 : vector<1x128xf32> to vector<256x128xf32>
    %12 = arith.addf %10, %11 : vector<256x128xf32>
    %cst_11 = arith.constant 0.000000e+00 : f32
    %13 = vector.broadcast %cst_11 : f32 to vector<256x128xf32>
    %14 = arith.maximumf %12, %13 : vector<256x128xf32>
    %c0_12 = arith.constant 0 : index
    %c128 = arith.constant 128 : index
    %15 = vector.load %arg4[%c0_12, %c128] : memref<128x768xf32, #tpu.memory_space<vmem>>, vector<128x128xf32>
    %c0_13 = arith.constant 0 : index
    %c128_14 = arith.constant 128 : index
    %16 = vector.load %arg5[%c0_13, %c128_14] : memref<1x768xf32, #tpu.memory_space<vmem>>, vector<1x128xf32>
    %cst_15 = arith.constant dense<0.000000e+00> : vector<256x128xf32>
    %17 = tpu.matmul %14, %15, %cst_15 {dimension_numbers = #tpu.dot_dimension_numbers<[1], [0], [0], [1], [0, 0, 1, 1], [], []>} : vector<256x128xf32>, vector<128x128xf32>, vector<256x128xf32> -> vector<256x128xf32>
    %18 = vector.broadcast %16 : vector<1x128xf32> to vector<256x128xf32>
    %19 = arith.addf %17, %18 : vector<256x128xf32>
    %cst_16 = arith.constant 0.000000e+00 : f32
    %20 = vector.broadcast %cst_16 : f32 to vector<256x128xf32>
    %21 = arith.maximumf %19, %20 : vector<256x128xf32>
    %c0_17 = arith.constant 0 : index
    %c256 = arith.constant 256 : index
    %22 = vector.load %arg4[%c0_17, %c256] : memref<128x768xf32, #tpu.memory_space<vmem>>, vector<128x128xf32>
    %c0_18 = arith.constant 0 : index
    %c256_19 = arith.constant 256 : index
    %23 = vector.load %arg5[%c0_18, %c256_19] : memref<1x768xf32, #tpu.memory_space<vmem>>, vector<1x128xf32>
    %cst_20 = arith.constant dense<0.000000e+00> : vector<256x128xf32>
    %24 = tpu.matmul %21, %22, %cst_20 {dimension_numbers = #tpu.dot_dimension_numbers<[1], [0], [0], [1], [0, 0, 1, 1], [], []>} : vector<256x128xf32>, vector<128x128xf32>, vector<256x128xf32> -> vector<256x128xf32>
    %25 = vector.broadcast %23 : vector<1x128xf32> to vector<256x128xf32>
    %26 = arith.addf %24, %25 : vector<256x128xf32>
    %27 = vector.shape_cast %26 : vector<256x128xf32> to vector<32x8x128xf32>
    %cst_21 = arith.constant dense<0.000000e+00> : vector<32x128xf32>
    %28 = vector.multi_reduction <add>, %27, %cst_21 [1] : vector<32x8x128xf32> to vector<32x128xf32>
    %cst_22 = arith.constant 8.000000e+00 : f32
    %29 = vector.broadcast %cst_22 : f32 to vector<32x128xf32>
    %30 = arith.divf %28, %29 : vector<32x128xf32>
    %c0_23 = arith.constant 0 : index
    %c384 = arith.constant 384 : index
    %31 = vector.load %arg4[%c0_23, %c384] : memref<128x768xf32, #tpu.memory_space<vmem>>, vector<128x128xf32>
    %c0_24 = arith.constant 0 : index
    %c384_25 = arith.constant 384 : index
    %32 = vector.load %arg5[%c0_24, %c384_25] : memref<1x768xf32, #tpu.memory_space<vmem>>, vector<1x128xf32>
    %cst_26 = arith.constant dense<0.000000e+00> : vector<32x128xf32>
    %33 = tpu.matmul %30, %31, %cst_26 {dimension_numbers = #tpu.dot_dimension_numbers<[1], [0], [0], [1], [0, 0, 1, 1], [], []>} : vector<32x128xf32>, vector<128x128xf32>, vector<32x128xf32> -> vector<32x128xf32>
    %34 = vector.broadcast %32 : vector<1x128xf32> to vector<32x128xf32>
    %35 = arith.addf %33, %34 : vector<32x128xf32>
    %cst_27 = arith.constant 0.000000e+00 : f32
    %36 = vector.broadcast %cst_27 : f32 to vector<32x128xf32>
    %37 = arith.maximumf %35, %36 : vector<32x128xf32>
    %c0_28 = arith.constant 0 : index
    %c512 = arith.constant 512 : index
    %38 = vector.load %arg4[%c0_28, %c512] : memref<128x768xf32, #tpu.memory_space<vmem>>, vector<128x128xf32>
    %c0_29 = arith.constant 0 : index
    %c512_30 = arith.constant 512 : index
    %39 = vector.load %arg5[%c0_29, %c512_30] : memref<1x768xf32, #tpu.memory_space<vmem>>, vector<1x128xf32>
    %cst_31 = arith.constant dense<0.000000e+00> : vector<32x128xf32>
    %40 = tpu.matmul %37, %38, %cst_31 {dimension_numbers = #tpu.dot_dimension_numbers<[1], [0], [0], [1], [0, 0, 1, 1], [], []>} : vector<32x128xf32>, vector<128x128xf32>, vector<32x128xf32> -> vector<32x128xf32>
    %41 = vector.broadcast %39 : vector<1x128xf32> to vector<32x128xf32>
    %42 = arith.addf %40, %41 : vector<32x128xf32>
    %cst_32 = arith.constant 0.000000e+00 : f32
    %43 = vector.broadcast %cst_32 : f32 to vector<32x128xf32>
    %44 = arith.maximumf %42, %43 : vector<32x128xf32>
    %c0_33 = arith.constant 0 : index
    %c640 = arith.constant 640 : index
    %45 = vector.load %arg4[%c0_33, %c640] : memref<128x768xf32, #tpu.memory_space<vmem>>, vector<128x128xf32>
    %c0_34 = arith.constant 0 : index
    %c640_35 = arith.constant 640 : index
    %46 = vector.load %arg5[%c0_34, %c640_35] : memref<1x768xf32, #tpu.memory_space<vmem>>, vector<1x128xf32>
    %cst_36 = arith.constant dense<0.000000e+00> : vector<32x128xf32>
    %47 = tpu.matmul %44, %45, %cst_36 {dimension_numbers = #tpu.dot_dimension_numbers<[1], [0], [0], [1], [0, 0, 1, 1], [], []>} : vector<32x128xf32>, vector<128x128xf32>, vector<32x128xf32> -> vector<32x128xf32>
    %48 = vector.broadcast %46 : vector<1x128xf32> to vector<32x128xf32>
    %49 = arith.addf %47, %48 : vector<32x128xf32>
    %cst_37 = arith.constant 0.000000e+00 : f32
    %50 = vector.broadcast %cst_37 : f32 to vector<32x128xf32>
    %51 = arith.maximumf %49, %50 : vector<32x128xf32>
    %c0_38 = arith.constant 0 : index
    %c0_39 = arith.constant 0 : index
    %52 = vector.load %arg6[%c0_38, %c0_39] : memref<128x128xf32, #tpu.memory_space<vmem>>, vector<128x128xf32>
    %cst_40 = arith.constant dense<0.000000e+00> : vector<32x128xf32>
    %53 = tpu.matmul %51, %52, %cst_40 {dimension_numbers = #tpu.dot_dimension_numbers<[1], [0], [0], [1], [0, 0, 1, 1], [], []>} : vector<32x128xf32>, vector<128x128xf32>, vector<32x128xf32> -> vector<32x128xf32>
    %c0_41 = arith.constant 0 : index
    %c0_42 = arith.constant 0 : index
    %54 = vector.load %arg7[%c0_41, %c0_42] : memref<1x128xf32, #tpu.memory_space<vmem>>, vector<1x128xf32>
    %55 = vector.broadcast %54 : vector<1x128xf32> to vector<32x128xf32>
    %56 = arith.addf %53, %55 : vector<32x128xf32>
    %c0_43 = arith.constant 0 : index
    %c0_44 = arith.constant 0 : index
    %57 = vector.load %arg8[%c0_43, %c0_44] : memref<32x128xf32, #tpu.memory_space<vmem>>, vector<32x128xf32>
    tpu.vector_store %arg8[%c0_43, %c0_44], %56 {strides = array<i32>} : memref<32x128xf32, #tpu.memory_space<vmem>>, vector<32x128xf32>,
    return
  }
  func.func @transform_0(%arg0: i32) -> (i32, i32) {
    %c0_i32 = arith.constant 0 : i32
    %c0_i32_0 = arith.constant 0 : i32
    return %arg0, %c0_i32 : i32, i32
  }
  func.func @transform_1(%arg0: i32) -> (i32, i32) {
    %c0_i32 = arith.constant 0 : i32
    %c0_i32_0 = arith.constant 0 : i32
    %c0_i32_1 = arith.constant 0 : i32
    return %c0_i32, %c0_i32_0 : i32, i32
  }
  func.func @transform_2(%arg0: i32) -> (i32, i32) {
    %c0_i32 = arith.constant 0 : i32
    %c0_i32_0 = arith.constant 0 : i32
    %c0_i32_1 = arith.constant 0 : i32
    return %c0_i32, %c0_i32_0 : i32, i32
  }
  func.func @transform_3(%arg0: i32) -> (i32, i32) {
    %c0_i32 = arith.constant 0 : i32
    %c0_i32_0 = arith.constant 0 : i32
    %c0_i32_1 = arith.constant 0 : i32
    return %c0_i32, %c0_i32_0 : i32, i32
  }
  func.func @transform_4(%arg0: i32) -> (i32, i32) {
    %c0_i32 = arith.constant 0 : i32
    %c0_i32_0 = arith.constant 0 : i32
    %c0_i32_1 = arith.constant 0 : i32
    return %c0_i32, %c0_i32_0 : i32, i32
  }
  func.func @transform_5(%arg0: i32) -> (i32, i32) {
    %c0_i32 = arith.constant 0 : i32
    %c0_i32_0 = arith.constant 0 : i32
    %c0_i32_1 = arith.constant 0 : i32
    return %c0_i32, %c0_i32_0 : i32, i32
  }
  func.func @transform_6(%arg0: i32) -> (i32, i32) {
    %c0_i32 = arith.constant 0 : i32
    %c0_i32_0 = arith.constant 0 : i32
    %c0_i32_1 = arith.constant 0 : i32
    return %c0_i32, %c0_i32_0 : i32, i32
  }
  func.func @transform_7(%arg0: i32) -> (i32, i32) {
    %c0_i32 = arith.constant 0 : i32
    %c0_i32_0 = arith.constant 0 : i32
    return %arg0, %c0_i32 : i32, i32
  }
}

</mosaic_0001>

<llo_original>
// kernel: tpu_custom_call.1
$region0: #{tpu_custom_call.1}
  #allocation0 [shape = 'u32[]', space=smem, size = 0x4, offset = 0x4, fixed_abs, tag = 'smem constant byte address 0x4 - core index']
  #allocation1 [shape = 'u32[72,128]{1,0:T(1,128)}', space=vmem, size = 0x9000, scoped, tag = 'internal scratch']
  %s0 = inlined_call_operand.vmem [shape: f32[512,4], index: 0, kind: input, shape index: {}]
  %s1 = inlined_call_operand.vmem [shape: f32[4,128], index: 1, kind: input, shape index: {}]
  %s2 = inlined_call_operand.vmem [shape: f32[1,128], index: 2, kind: input, shape index: {}]
  %s3 = inlined_call_operand.hbm [shape: f32[128,768], index: 3, kind: input, shape index: {}]
  %s4 = inlined_call_operand.vmem [shape: f32[1,768], index: 4, kind: input, shape index: {}]
  %s5 = inlined_call_operand.vmem [shape: f32[128,128], index: 5, kind: input, shape index: {}]
  %s6 = inlined_call_operand.vmem [shape: f32[1,128], index: 6, kind: input, shape index: {}]
  %s7 = inlined_call_operand.hbm [shape: f32[64,128], index: 7, kind: output, shape index: {}]
  %s8 = sld [smem:[#allocation0]]
  $region65: #{tpu_custom_call.1} parent=0
    _
  %s10 = ssub.s32 1, %s8
  %s11 = scalar_select 0, %s10, %s8
  $region1: #{tpu_custom_call.1} parent=0
    #allocation2 [shape = 'u8[393216]{0}', space=vmem, size = 0x60000, scoped, tag = 'input window, operand 3, single buffered']
    #allocation3 [shape = 's32[2]{0}', space=sflag, size = 0x8, scoped, tag = 'scoped memory for tpu_custom_call.1']
    #allocation4 [shape = 's32[2]{0}', space=sflag, size = 0x8, scoped, tag = 'scoped memory for tpu_custom_call.1']
    #allocation5 [shape = 'u8[32768]{0}', space=vmem, size = 0x8000, scoped, tag = 'output window, operand 0']
    %12 = vsyncpa [#allocation3], 0
    %13 = vsyncpa [#allocation4], 0
    %s14 = scalar_lea.sflag [#allocation4], 1
    %15 = vsyncpa %s14, 0
    loop: start=0, step=1, limit=4
    $region2: #{tpu_custom_call.1} parent=1 // loop_pre_header
      _
    $region3: #{tpu_custom_call.1} parent=1 // loop_header
      %s17 = sphi 0, %s21
      %p18 = scmp.ge.s32.totalorder %s17, 4
      %s27 = sphi 0, %s29
      %s30 = sphi 0, %s27
      %s31 = sphi 0, %s30
      %s47 = sphi 0, %s31
      %s51 = sphi 0, %s51
      %s53 = sphi 0, %s51
      %s54 = sphi 0, %s53
      %s68 = sphi 0, %s54
      %s72 = sphi 0, %s72
      %s74 = sphi 0, %s72
      %s75 = sphi 0, %s74
      %s89 = sphi 0, %s75
      %s93 = sphi 0, %s93
      %s95 = sphi 0, %s93
      %s96 = sphi 0, %s95
      %s110 = sphi 0, %s96
      %s114 = sphi 0, %s114
      %s116 = sphi 0, %s114
      %s117 = sphi 0, %s116
      %s131 = sphi 0, %s117
      %s135 = sphi 0, %s135
      %s137 = sphi 0, %s135
      %s138 = sphi 0, %s137
      %s152 = sphi 0, %s138
      %s156 = sphi 0, %s156
      %s158 = sphi 0, %s156
      %s159 = sphi 0, %s158
      %s173 = sphi 0, %s159
      %s179 = sphi 0, %s181
      %s182 = sphi 0, %s179
      %s183 = sphi 0, %s182
      %s199 = sphi 0, %s183
    $region4: #{tpu_custom_call.1} parent=1 // loop_header_branch
      %20 = sbr.rel (%p18) target = $region8
    $region5: #{tpu_custom_call.1} parent=1 // loop_body
      %s22 = ssub.s32 %s17, 1
      %s23 = ssub.s32 %s17, 2
      %s24 = sadd.s32 %s17, 1
      %s25 = ssub.s32 %s17, %s24
      %p26 = scmp.eq.s32.totalorder %s25, 0
      %s28 = sadd.s32 %s27, 1
      %s29 = scalar_select %p26, %s27, %s28
      %p32 = pneg %p26
      %p33 = scmp.eq.s32.totalorder %s17, 1
      %p34 = por %p32, %p33
      %p35 = scmp.ne.s32.totalorder %s27, %s30
      %p36 = scmp.eq.s32.totalorder %s17, 0
      %p37 = por %p35, %p36
      %p38 = scmp.ne.s32.totalorder %s27, %s30
      %p39 = scmp.eq.s32.totalorder %s22, 1
      %p40 = por %p38, %p39
      %p41 = scmp.ne.s32.totalorder %s30, %s31
      %p42 = scmp.eq.s32.totalorder %s22, 0
      %p43 = por %p41, %p42
      %p44 = scmp.ne.s32.totalorder %s30, %s31
      %p45 = scmp.eq.s32.totalorder %s23, 1
      %p46 = por %p44, %p45
      %p48 = scmp.ne.s32.totalorder %s31, %s47
      %p49 = scmp.eq.s32.totalorder %s23, 0
      %p50 = por %p48, %p49
      %s52 = sadd.s32 %s51, 1
      %p55 = scmp.eq.s32.totalorder %s17, 1
      %p56 = scmp.ne.s32.totalorder %s51, %s53
      %p57 = scmp.eq.s32.totalorder %s17, 0
      %p58 = por %p56, %p57
      %p59 = scmp.ne.s32.totalorder %s51, %s53
      %p60 = scmp.eq.s32.totalorder %s22, 1
      %p61 = por %p59, %p60
      %p62 = scmp.ne.s32.totalorder %s53, %s54
      %p63 = scmp.eq.s32.totalorder %s22, 0
      %p64 = por %p62, %p63
      %p65 = scmp.ne.s32.totalorder %s53, %s54
      %p66 = scmp.eq.s32.totalorder %s23, 1
      %p67 = por %p65, %p66
      %p69 = scmp.ne.s32.totalorder %s54, %s68
      %p70 = scmp.eq.s32.totalorder %s23, 0
      %p71 = por %p69, %p70
      %s73 = sadd.s32 %s72, 1
      %p76 = scmp.eq.s32.totalorder %s17, 1
      %p77 = scmp.ne.s32.totalorder %s72, %s74
      %p78 = scmp.eq.s32.totalorder %s17, 0
      %p79 = por %p77, %p78
      %p80 = scmp.ne.s32.totalorder %s72, %s74
      %p81 = scmp.eq.s32.totalorder %s22, 1
      %p82 = por %p80, %p81
      %p83 = scmp.ne.s32.totalorder %s74, %s75
      %p84 = scmp.eq.s32.totalorder %s22, 0
      %p85 = por %p83, %p84
      %p86 = scmp.ne.s32.totalorder %s74, %s75
      %p87 = scmp.eq.s32.totalorder %s23, 1
      %p88 = por %p86, %p87
      %p90 = scmp.ne.s32.totalorder %s75, %s89
      %p91 = scmp.eq.s32.totalorder %s23, 0
      %p92 = por %p90, %p91
      %s94 = sadd.s32 %s93, 1
      %p97 = scmp.eq.s32.totalorder %s17, 1
      %p98 = scmp.ne.s32.totalorder %s93, %s95
      %p99 = scmp.eq.s32.totalorder %s17, 0
      %p100 = por %p98, %p99
      %p101 = scmp.ne.s32.totalorder %s93, %s95
      %p102 = scmp.eq.s32.totalorder %s22, 1
      %p103 = por %p101, %p102
      %p104 = scmp.ne.s32.totalorder %s95, %s96
      %p105 = scmp.eq.s32.totalorder %s22, 0
      %p106 = por %p104, %p105
      %p107 = scmp.ne.s32.totalorder %s95, %s96
      %p108 = scmp.eq.s32.totalorder %s23, 1
      %p109 = por %p107, %p108
      %p111 = scmp.ne.s32.totalorder %s96, %s110
      %p112 = scmp.eq.s32.totalorder %s23, 0
      %p113 = por %p111, %p112
      %s115 = sadd.s32 %s114, 1
      %p118 = scmp.eq.s32.totalorder %s17, 1
      %p119 = scmp.ne.s32.totalorder %s114, %s116
      %p120 = scmp.eq.s32.totalorder %s17, 0
      %p121 = por %p119, %p120
      %p122 = scmp.ne.s32.totalorder %s114, %s116
      %p123 = scmp.eq.s32.totalorder %s22, 1
      %p124 = por %p122, %p123
      %p125 = scmp.ne.s32.totalorder %s116, %s117
      %p126 = scmp.eq.s32.totalorder %s22, 0
      %p127 = por %p125, %p126
      %p128 = scmp.ne.s32.totalorder %s116, %s117
      %p129 = scmp.eq.s32.totalorder %s23, 1
      %p130 = por %p128, %p129
      %p132 = scmp.ne.s32.totalorder %s117, %s131
      %p133 = scmp.eq.s32.totalorder %s23, 0
      %p134 = por %p132, %p133
      %s136 = sadd.s32 %s135, 1
      %p139 = scmp.eq.s32.totalorder %s17, 1
      %p140 = scmp.ne.s32.totalorder %s135, %s137
      %p141 = scmp.eq.s32.totalorder %s17, 0
      %p142 = por %p140, %p141
      %p143 = scmp.ne.s32.totalorder %s135, %s137
      %p144 = scmp.eq.s32.totalorder %s22, 1
      %p145 = por %p143, %p144
      %p146 = scmp.ne.s32.totalorder %s137, %s138
      %p147 = scmp.eq.s32.totalorder %s22, 0
      %p148 = por %p146, %p147
      %p149 = scmp.ne.s32.totalorder %s137, %s138
      %p150 = scmp.eq.s32.totalorder %s23, 1
      %p151 = por %p149, %p150
      %p153 = scmp.ne.s32.totalorder %s138, %s152
      %p154 = scmp.eq.s32.totalorder %s23, 0
      %p155 = por %p153, %p154
      %s157 = sadd.s32 %s156, 1
      %p160 = scmp.eq.s32.totalorder %s17, 1
      %p161 = scmp.ne.s32.totalorder %s156, %s158
      %p162 = scmp.eq.s32.totalorder %s17, 0
      %p163 = por %p161, %p162
      %p164 = scmp.ne.s32.totalorder %s156, %s158
      %p165 = scmp.eq.s32.totalorder %s22, 1
      %p166 = por %p164, %p165
      %p167 = scmp.ne.s32.totalorder %s158, %s159
      %p168 = scmp.eq.s32.totalorder %s22, 0
      %p169 = por %p167, %p168
      %p170 = scmp.ne.s32.totalorder %s158, %s159
      %p171 = scmp.eq.s32.totalorder %s23, 1
      %p172 = por %p170, %p171
      %p174 = scmp.ne.s32.totalorder %s159, %s173
      %p175 = scmp.eq.s32.totalorder %s23, 0
      %p176 = por %p174, %p175
      %s177 = ssub.s32 %s17, %s24
      %p178 = scmp.eq.s32.totalorder %s177, 0
      %s180 = sadd.s32 %s179, 1
      %s181 = scalar_select %p178, %s179, %s180
      %p184 = pneg %p178
      %p185 = scmp.eq.s32.totalorder %s17, 1
      %p186 = por %p184, %p185
      %p187 = scmp.ne.s32.totalorder %s179, %s182
      %p188 = scmp.eq.s32.totalorder %s17, 0
      %p189 = por %p187, %p188
      %p190 = scmp.ne.s32.totalorder %s179, %s182
      %p191 = scmp.eq.s32.totalorder %s22, 1
      %p192 = por %p190, %p191
      %p193 = scmp.ne.s32.totalorder %s182, %s183
      %p194 = scmp.eq.s32.totalorder %s22, 0
      %p195 = por %p193, %p194
      %p196 = scmp.ne.s32.totalorder %s182, %s183
      %p197 = scmp.eq.s32.totalorder %s23, 1
      %p198 = por %p196, %p197
      %p200 = scmp.ne.s32.totalorder %s183, %s199
      %p201 = scmp.eq.s32.totalorder %s23, 0
      %p202 = por %p200, %p201
      %p203 = scmp.le.s32.totalorder 1, %s17
      %p204 = scmp.lt.s32.totalorder %s17, 3
      %p205 = pnand %p203, %p204
      %p206 = pneg %p205
      // Predicated region
      $region9: #{tpu_custom_call.1} parent=5 // pred_check
        _
      $region10: #{tpu_custom_call.1} parent=5 // pred_check_branch
        %208 = sbr.rel (%p205) target = $region12
      $region11: #{tpu_custom_call.1} parent=5 // pred_region
        %s209 = ssub.s32 %s17, 1
        // Predicated region
        $region13: #{tpu_custom_call.1} parent=11 // pred_check
          %p210 = pneg %p64
        $region14: #{tpu_custom_call.1} parent=11 // pred_check_branch
          %212 = sbr.rel (%p210) target = $region16
        $region15: #{tpu_custom_call.1} parent=11 // pred_region
          _
        $region16: #{tpu_custom_call.1} parent=11 // pred_fallthru
          _
        // Predicated region
        $region17: #{tpu_custom_call.1} parent=11 // pred_check
          %p213 = pneg %p85
        $region18: #{tpu_custom_call.1} parent=11 // pred_check_branch
          %215 = sbr.rel (%p213) target = $region20
        $region19: #{tpu_custom_call.1} parent=11 // pred_region
          _
        $region20: #{tpu_custom_call.1} parent=11 // pred_fallthru
          _
        // Predicated region
        $region21: #{tpu_custom_call.1} parent=11 // pred_check
          %p216 = pneg %p106
        $region22: #{tpu_custom_call.1} parent=11 // pred_check_branch
          %218 = sbr.rel (%p216) target = $region24
        $region23: #{tpu_custom_call.1} parent=11 // pred_region
          %220 = vsyncadd [#allocation3], 0
          %s221 = sshll.u32 %s3, 4
          %s222 = int_to_ptr.hbm [resolvable:$true] %s221
          %s223 = sshll.u32 [#allocation2], 4
          %s224 = int_to_ptr.vmem [resolvable:$true] %s223
          %229 = dma.hbm_to_vmem [thread:$0]  %s222, 12288, %s224, [#allocation3], 768, 768, 48
        $region24: #{tpu_custom_call.1} parent=11 // pred_fallthru
          _
        // Predicated region
        $region25: #{tpu_custom_call.1} parent=11 // pred_check
          %p230 = pneg %p127
        $region26: #{tpu_custom_call.1} parent=11 // pred_check_branch
          %232 = sbr.rel (%p230) target = $region28
        $region27: #{tpu_custom_call.1} parent=11 // pred_region
          _
        $region28: #{tpu_custom_call.1} parent=11 // pred_fallthru
          _
        // Predicated region
        $region29: #{tpu_custom_call.1} parent=11 // pred_check
          %p233 = pneg %p148
        $region30: #{tpu_custom_call.1} parent=11 // pred_check_branch
          %235 = sbr.rel (%p233) target = $region32
        $region31: #{tpu_custom_call.1} parent=11 // pred_region
          _
        $region32: #{tpu_custom_call.1} parent=11 // pred_fallthru
          _
        // Predicated region
        $region33: #{tpu_custom_call.1} parent=11 // pred_check
          %p236 = pneg %p169
        $region34: #{tpu_custom_call.1} parent=11 // pred_check_branch
          %238 = sbr.rel (%p236) target = $region36
        $region35: #{tpu_custom_call.1} parent=11 // pred_region
          _
        $region36: #{tpu_custom_call.1} parent=11 // pred_fallthru
          _
      $region12: #{tpu_custom_call.1} parent=5 // pred_fallthru
        _
      %p239 = scmp.lt.s32.totalorder %s17, 2
      // Predicated region
      $region37: #{tpu_custom_call.1} parent=5 // pred_check
        %p240 = pneg %p239
      $region38: #{tpu_custom_call.1} parent=5 // pred_check_branch
        %242 = sbr.rel (%p240) target = $region40
      $region39: #{tpu_custom_call.1} parent=5 // pred_region
        // Predicated region
        $region41: #{tpu_custom_call.1} parent=39 // pred_check
          %p243 = pneg %p37
        $region42: #{tpu_custom_call.1} parent=39 // pred_check_branch
          %245 = sbr.rel (%p243) target = $region44
        $region43: #{tpu_custom_call.1} parent=39 // pred_region
          %s246 = smul.u32 32, %s17
          %p247 = scmp.lt.s32.totalorder %s246, 63
          %s248 = scalar_select %p247, %s246, 63
          %s249 = smul.addr %s248, 8
          %s250 = scalar_lea.vmem %s0, %s249
          %s251 = smul.u32 32, %s17
        $region44: #{tpu_custom_call.1} parent=39 // pred_fallthru
          _
      $region40: #{tpu_custom_call.1} parent=5 // pred_fallthru
        _
      %p252 = scmp.le.s32.totalorder 1, %s17
      %p253 = scmp.lt.s32.totalorder %s17, 3
      %p254 = pnand %p252, %p253
      %p255 = pneg %p254
      // Predicated region
      $region45: #{tpu_custom_call.1} parent=5 // pred_check
        _
      $region46: #{tpu_custom_call.1} parent=5 // pred_check_branch
        %257 = sbr.rel (%p254) target = $region48
      $region47: #{tpu_custom_call.1} parent=5 // pred_region
        %s258 = ssub.s32 %s17, 1
        // Predicated region
        $region49: #{tpu_custom_call.1} parent=47 // pred_check
          %p259 = pneg %p106
        $region50: #{tpu_custom_call.1} parent=47 // pred_check_branch
          %261 = sbr.rel (%p259) target = $region52
        $region51: #{tpu_custom_call.1} parent=47 // pred_region
          %263 = dma.done [#allocation3], 12288
        $region52: #{tpu_custom_call.1} parent=47 // pred_fallthru
          _
        %s264 = smul.u32 32, %s22
        %p265 = scmp.lt.s32.totalorder %s264, 63
        %s266 = scalar_select %p265, %s264, 63
        %s267 = smul.addr %s266, 8
        %s268 = scalar_lea.vmem %s0, %s267
        %p269 = pneg %p43
        %p270 = pneg %p40
        %p271 = pneg %p64
        %p272 = pneg %p61
        %p273 = pneg %p85
        %p274 = pneg %p82
        %p275 = pneg %p106
        %p276 = pneg %p103
        %p277 = pneg %p127
        %p278 = pneg %p124
        %p279 = pneg %p148
        %p280 = pneg %p145
        %p281 = pneg %p169
        %p282 = pneg %p166
        %p283 = pneg %p195
        %p284 = pneg %p192
        %s285 = sand.u32 %s182, 1
        %s286 = scalar_lea.sflag [#allocation4], %s285
        %s287 = sand.u32 %s182, 1
        %s288 = smul.addr %s287, 32
        %s289 = scalar_lea.vmem [#allocation5], %s288
        %s290 = smul.u32 32, %s22
        %p291 = scmp.lt.s32.totalorder %s290, 63
        %s292 = scalar_select %p291, %s290, 63
        %s293 = smul.addr %s292, 8
        %s294 = scalar_lea.vmem %s0, %s293
        %s295 = smul.u32 32, %s22
        %s296 = smul.u32 4, %s22
        %v297 = vld [vmem:[%s294] sm:$0xff]
        %v298 = vld [vmem:[%s294 + $0x8] sm:$0xff]
        %v299 = vld [vmem:[%s294 + $0x10] sm:$0xff]
        %v300 = vld [vmem:[%s294 + $0x18] sm:$0xff]
        %v301 = vld [vmem:[%s294 + $0x20] sm:$0xff]
        %v302 = vld [vmem:[%s294 + $0x28] sm:$0xff]
        %v303 = vld [vmem:[%s294 + $0x30] sm:$0xff]
        %v304 = vld [vmem:[%s294 + $0x38] sm:$0xff]
        %v305 = vld [vmem:[%s294 + $0x40] sm:$0xff]
        %v306 = vld [vmem:[%s294 + $0x48] sm:$0xff]
        %v307 = vld [vmem:[%s294 + $0x50] sm:$0xff]
        %v308 = vld [vmem:[%s294 + $0x58] sm:$0xff]
        %v309 = vld [vmem:[%s294 + $0x60] sm:$0xff]
        %v310 = vld [vmem:[%s294 + $0x68] sm:$0xff]
        %v311 = vld [vmem:[%s294 + $0x70] sm:$0xff]
        %v312 = vld [vmem:[%s294 + $0x78] sm:$0xff]
        %v313 = vld [vmem:[%s294 + $0x80] sm:$0xff]
        %v314 = vld [vmem:[%s294 + $0x88] sm:$0xff]
        %v315 = vld [vmem:[%s294 + $0x90] sm:$0xff]
        %v316 = vld [vmem:[%s294 + $0x98] sm:$0xff]
        %v317 = vld [vmem:[%s294 + $0xa0] sm:$0xff]
        %v318 = vld [vmem:[%s294 + $0xa8] sm:$0xff]
        %v319 = vld [vmem:[%s294 + $0xb0] sm:$0xff]
        %v320 = vld [vmem:[%s294 + $0xb8] sm:$0xff]
        %v321 = vld [vmem:[%s294 + $0xc0] sm:$0xff]
        %v322 = vld [vmem:[%s294 + $0xc8] sm:$0xff]
        %v323 = vld [vmem:[%s294 + $0xd0] sm:$0xff]
        %v324 = vld [vmem:[%s294 + $0xd8] sm:$0xff]
        %v325 = vld [vmem:[%s294 + $0xe0] sm:$0xff]
        %v326 = vld [vmem:[%s294 + $0xe8] sm:$0xff]
        %v327 = vld [vmem:[%s294 + $0xf0] sm:$0xff]
        %v328 = vld [vmem:[%s294 + $0xf8] sm:$0xff]
        %v329 = vld [vmem:[%s1] sm:$0xf]
        %v330 = vld [vmem:[%s2] sm:$0x1]
        %v332 = vperm.slane %v330, 0
        %vm334 = vcmask 31744
        %v336 = vsel %vm334, %v297, 0
        %v339 = vsel %vm334, %v298, 0
        %v342 = vsel %vm334, %v299, 0
        %v345 = vsel %vm334, %v300, 0
        %v348 = vsel %vm334, %v301, 0
        %v351 = vsel %vm334, %v302, 0
        %v354 = vsel %vm334, %v303, 0
        %v357 = vsel %vm334, %v304, 0
        %v360 = vsel %vm334, %v305, 0
        %v363 = vsel %vm334, %v306, 0
        %v366 = vsel %vm334, %v307, 0
        %v369 = vsel %vm334, %v308, 0
        %v372 = vsel %vm334, %v309, 0
        %v375 = vsel %vm334, %v310, 0
        %v378 = vsel %vm334, %v311, 0
        %v381 = vsel %vm334, %v312, 0
        %v384 = vsel %vm334, %v313, 0
        %v387 = vsel %vm334, %v314, 0
        %v390 = vsel %vm334, %v315, 0
        %v393 = vsel %vm334, %v316, 0
        %v396 = vsel %vm334, %v317, 0
        %v399 = vsel %vm334, %v318, 0
        %v402 = vsel %vm334, %v319, 0
        %v405 = vsel %vm334, %v320, 0
        %v408 = vsel %vm334, %v321, 0
        %v411 = vsel %vm334, %v322, 0
        %v414 = vsel %vm334, %v323, 0
        %v417 = vsel %vm334, %v324, 0
        %v420 = vsel %vm334, %v325, 0
        %v423 = vsel %vm334, %v326, 0
        %v426 = vsel %vm334, %v327, 0
        %v429 = vsel %vm334, %v328, 0
        %vm431 = vcmask 1043456
        %v433 = vsel %vm431, %v329, 0
        %435 = vmatpush.msra.mxu0 0.0
        %436 = vmatpush.msra.mxu0 0.0
        %437 = vmatpush.msra.mxu0 0.0
        %438 = vmatpush.msra.mxu0 0.0
        %439 = vmatpush.msra.mxu0 0.0
        %440 = vmatpush.msra.mxu0 0.0
        %441 = vmatpush.msra.mxu0 0.0
        %442 = vmatpush.msra.mxu0 0.0
        %443 = vmatpush.msra.mxu0 0.0
        %444 = vmatpush.msra.mxu0 0.0
        %445 = vmatpush.msra.mxu0 0.0
        %446 = vmatpush.msra.mxu0 0.0
        %447 = vmatpush.msra.mxu0 0.0
        %448 = vmatpush.msra.mxu0 0.0
        %449 = vmatpush.msra.mxu0 0.0
        %450 = vmatpush.msra.mxu0 %v433
        %451 = vmatmul.f32.gmra.mxu0 %v336
        %v452 = vpop.f32.mrf.mxu0
        %v453 = vadd.f32 %v332, %v452
        %454 = vmatmul.f32.gmra.mxu0 %v339
        %v455 = vpop.f32.mrf.mxu0
        %v456 = vadd.f32 %v332, %v455
        %457 = vmatmul.f32.gmra.mxu0 %v342
        %v458 = vpop.f32.mrf.mxu0
        %v459 = vadd.f32 %v332, %v458
        %460 = vmatmul.f32.gmra.mxu0 %v345
        %v461 = vpop.f32.mrf.mxu0
        %v462 = vadd.f32 %v332, %v461
        %463 = vmatmul.f32.gmra.mxu0 %v348
        %v464 = vpop.f32.mrf.mxu0
        %v465 = vadd.f32 %v332, %v464
        %466 = vmatmul.f32.gmra.mxu0 %v351
        %v467 = vpop.f32.mrf.mxu0
        %v468 = vadd.f32 %v332, %v467
        %469 = vmatmul.f32.gmra.mxu0 %v354
        %v470 = vpop.f32.mrf.mxu0
        %v471 = vadd.f32 %v332, %v470
        %472 = vmatmul.f32.gmra.mxu0 %v357
        %v473 = vpop.f32.mrf.mxu0
        %v474 = vadd.f32 %v332, %v473
        %475 = vmatmul.f32.gmra.mxu0 %v360
        %v476 = vpop.f32.mrf.mxu0
        %v477 = vadd.f32 %v332, %v476
        %478 = vmatmul.f32.gmra.mxu0 %v363
        %v479 = vpop.f32.mrf.mxu0
        %v480 = vadd.f32 %v332, %v479
        %481 = vmatmul.f32.gmra.mxu0 %v366
        %v482 = vpop.f32.mrf.mxu0
        %v483 = vadd.f32 %v332, %v482
        %484 = vmatmul.f32.gmra.mxu0 %v369
        %v485 = vpop.f32.mrf.mxu0
        %v486 = vadd.f32 %v332, %v485
        %487 = vmatmul.f32.gmra.mxu0 %v372
        %v488 = vpop.f32.mrf.mxu0
        %v489 = vadd.f32 %v332, %v488
        %490 = vmatmul.f32.gmra.mxu0 %v375
        %v491 = vpop.f32.mrf.mxu0
        %v492 = vadd.f32 %v332, %v491
        %493 = vmatmul.f32.gmra.mxu0 %v378
        %v494 = vpop.f32.mrf.mxu0
        %v495 = vadd.f32 %v332, %v494
        %496 = vmatmul.f32.gmra.mxu0 %v381
        %v497 = vpop.f32.mrf.mxu0
        %v498 = vadd.f32 %v332, %v497
        %499 = vmatmul.f32.gmra.mxu0 %v384
        %v500 = vpop.f32.mrf.mxu0
        %v501 = vadd.f32 %v332, %v500
        %502 = vmatmul.f32.gmra.mxu0 %v387
        %v503 = vpop.f32.mrf.mxu0
        %v504 = vadd.f32 %v332, %v503
        %505 = vmatmul.f32.gmra.mxu0 %v390
        %v506 = vpop.f32.mrf.mxu0
        %v507 = vadd.f32 %v332, %v506
        %508 = vmatmul.f32.gmra.mxu0 %v393
        %v509 = vpop.f32.mrf.mxu0
        %v510 = vadd.f32 %v332, %v509
        %511 = vmatmul.f32.gmra.mxu0 %v396
        %v512 = vpop.f32.mrf.mxu0
        %v513 = vadd.f32 %v332, %v512
        %514 = vmatmul.f32.gmra.mxu0 %v399
        %v515 = vpop.f32.mrf.mxu0
        %v516 = vadd.f32 %v332, %v515
        %517 = vmatmul.f32.gmra.mxu0 %v402
        %v518 = vpop.f32.mrf.mxu0
        %v519 = vadd.f32 %v332, %v518
        %520 = vmatmul.f32.gmra.mxu0 %v405
        %v521 = vpop.f32.mrf.mxu0
        %v522 = vadd.f32 %v332, %v521
        %523 = vmatmul.f32.gmra.mxu0 %v408
        %v524 = vpop.f32.mrf.mxu0
        %v525 = vadd.f32 %v332, %v524
        %526 = vmatmul.f32.gmra.mxu0 %v411
        %v527 = vpop.f32.mrf.mxu0
        %v528 = vadd.f32 %v332, %v527
        %529 = vmatmul.f32.gmra.mxu0 %v414
        %v530 = vpop.f32.mrf.mxu0
        %v531 = vadd.f32 %v332, %v530
        %532 = vmatmul.f32.gmra.mxu0 %v417
        %v533 = vpop.f32.mrf.mxu0
        %v534 = vadd.f32 %v332, %v533
        %535 = vmatmul.f32.gmra.mxu0 %v420
        %v536 = vpop.f32.mrf.mxu0
        %v537 = vadd.f32 %v332, %v536
        %538 = vmatmul.f32.gmra.mxu0 %v423
        %v539 = vpop.f32.mrf.mxu0
        %v540 = vadd.f32 %v332, %v539
        %541 = vmatmul.f32.gmra.mxu0 %v426
        %v542 = vpop.f32.mrf.mxu0
        %v543 = vadd.f32 %v332, %v542
        %544 = vmatmul.f32.gmra.mxu0 %v429
        %v545 = vpop.f32.mrf.mxu0
        %v546 = vadd.f32 %v332, %v545
        %547 = vdwg.mxu0
        %v548 = vmax.f32 %v453, 0.0
        %v549 = vmax.f32 %v456, 0.0
        %v550 = vmax.f32 %v459, 0.0
        %v551 = vmax.f32 %v462, 0.0
        %v552 = vmax.f32 %v465, 0.0
        %v553 = vmax.f32 %v468, 0.0
        %v554 = vmax.f32 %v471, 0.0
        %v555 = vmax.f32 %v474, 0.0
        %v556 = vmax.f32 %v477, 0.0
        %v557 = vmax.f32 %v480, 0.0
        %v558 = vmax.f32 %v483, 0.0
        %v559 = vmax.f32 %v486, 0.0
        %v560 = vmax.f32 %v489, 0.0
        %v561 = vmax.f32 %v492, 0.0
        %v562 = vmax.f32 %v495, 0.0
        %v563 = vmax.f32 %v498, 0.0
        %v564 = vmax.f32 %v501, 0.0
        %v565 = vmax.f32 %v504, 0.0
        %v566 = vmax.f32 %v507, 0.0
        %v567 = vmax.f32 %v510, 0.0
        %v568 = vmax.f32 %v513, 0.0
        %v569 = vmax.f32 %v516, 0.0
        %v570 = vmax.f32 %v519, 0.0
        %v571 = vmax.f32 %v522, 0.0
        %v572 = vmax.f32 %v525, 0.0
        %v573 = vmax.f32 %v528, 0.0
        %v574 = vmax.f32 %v531, 0.0
        %v575 = vmax.f32 %v534, 0.0
        %v576 = vmax.f32 %v537, 0.0
        %v577 = vmax.f32 %v540, 0.0
        %v578 = vmax.f32 %v543, 0.0
        %v579 = vmax.f32 %v546, 0.0
        %v580 = vld [vmem:[#allocation2] sm:$0xff]
        %v581 = vld [vmem:[#allocation2 + $0x30] sm:$0xff]
        %v582 = vld [vmem:[#allocation2 + $0x60] sm:$0xff]
        %v583 = vld [vmem:[#allocation2 + $0x90] sm:$0xff]
        %v584 = vld [vmem:[#allocation2 + $0xc0] sm:$0xff]
        %v585 = vld [vmem:[#allocation2 + $0xf0] sm:$0xff]
        %v586 = vld [vmem:[#allocation2 + $0x120] sm:$0xff]
        %v587 = vld [vmem:[#allocation2 + $0x150] sm:$0xff]
        %v588 = vld [vmem:[#allocation2 + $0x180] sm:$0xff]
        %v589 = vld [vmem:[#allocation2 + $0x1b0] sm:$0xff]
        %v590 = vld [vmem:[#allocation2 + $0x1e0] sm:$0xff]
        %v591 = vld [vmem:[#allocation2 + $0x210] sm:$0xff]
        %v592 = vld [vmem:[#allocation2 + $0x240] sm:$0xff]
        %v593 = vld [vmem:[#allocation2 + $0x270] sm:$0xff]
        %v594 = vld [vmem:[#allocation2 + $0x2a0] sm:$0xff]
        %v595 = vld [vmem:[#allocation2 + $0x2d0] sm:$0xff]
        %v596 = vld [vmem:[%s4] sm:$0x1]
        %v598 = vperm.slane %v596, 0
        %600 = vmatpush.msra.mxu0 %v595
        %601 = vmatpush.msra.mxu0 %v594
        %602 = vmatpush.msra.mxu0 %v593
        %603 = vmatpush.msra.mxu0 %v592
        %604 = vmatpush.msra.mxu0 %v591
        %605 = vmatpush.msra.mxu0 %v590
        %606 = vmatpush.msra.mxu0 %v589
        %607 = vmatpush.msra.mxu0 %v588
        %608 = vmatpush.msra.mxu0 %v587
        %609 = vmatpush.msra.mxu0 %v586
        %610 = vmatpush.msra.mxu0 %v585
        %611 = vmatpush.msra.mxu0 %v584
        %612 = vmatpush.msra.mxu0 %v583
        %613 = vmatpush.msra.mxu0 %v582
        %614 = vmatpush.msra.mxu0 %v581
        %615 = vmatpush.msra.mxu0 %v580
        %616 = vmatmul.f32.gmra.mxu0 %v548
        %v617 = vpop.f32.mrf.mxu0
        %v618 = vadd.f32 %v598, %v617
        %619 = vmatmul.f32.gmra.mxu0 %v549
        %v620 = vpop.f32.mrf.mxu0
        %v621 = vadd.f32 %v598, %v620
        %622 = vmatmul.f32.gmra.mxu0 %v550
        %v623 = vpop.f32.mrf.mxu0
        %v624 = vadd.f32 %v598, %v623
        %625 = vmatmul.f32.gmra.mxu0 %v551
        %v626 = vpop.f32.mrf.mxu0
        %v627 = vadd.f32 %v598, %v626
        %628 = vmatmul.f32.gmra.mxu0 %v552
        %v629 = vpop.f32.mrf.mxu0
        %v630 = vadd.f32 %v598, %v629
        %631 = vmatmul.f32.gmra.mxu0 %v553
        %v632 = vpop.f32.mrf.mxu0
        %v633 = vadd.f32 %v598, %v632
        %634 = vmatmul.f32.gmra.mxu0 %v554
        %v635 = vpop.f32.mrf.mxu0
        %v636 = vadd.f32 %v598, %v635
        %637 = vmatmul.f32.gmra.mxu0 %v555
        %v638 = vpop.f32.mrf.mxu0
        %v639 = vadd.f32 %v598, %v638
        %640 = vmatmul.f32.gmra.mxu0 %v556
        %v641 = vpop.f32.mrf.mxu0
        %v642 = vadd.f32 %v598, %v641
        %643 = vmatmul.f32.gmra.mxu0 %v557
        %v644 = vpop.f32.mrf.mxu0
        %v645 = vadd.f32 %v598, %v644
        %646 = vmatmul.f32.gmra.mxu0 %v558
        %v647 = vpop.f32.mrf.mxu0
        %v648 = vadd.f32 %v598, %v647
        %649 = vmatmul.f32.gmra.mxu0 %v559
        %v650 = vpop.f32.mrf.mxu0
        %v651 = vadd.f32 %v598, %v650
        %652 = vmatmul.f32.gmra.mxu0 %v560
        %v653 = vpop.f32.mrf.mxu0
        %v654 = vadd.f32 %v598, %v653
        %655 = vmatmul.f32.gmra.mxu0 %v561
        %v656 = vpop.f32.mrf.mxu0
        %v657 = vadd.f32 %v598, %v656
        %658 = vmatmul.f32.gmra.mxu0 %v562
        %v659 = vpop.f32.mrf.mxu0
        %v660 = vadd.f32 %v598, %v659
        %661 = vmatmul.f32.gmra.mxu0 %v563
        %v662 = vpop.f32.mrf.mxu0
        %v663 = vadd.f32 %v598, %v662
        %664 = vmatmul.f32.gmra.mxu0 %v564
        %v665 = vpop.f32.mrf.mxu0
        %v666 = vadd.f32 %v598, %v665
        %667 = vmatmul.f32.gmra.mxu0 %v565
        %v668 = vpop.f32.mrf.mxu0
        %v669 = vadd.f32 %v598, %v668
        %670 = vmatmul.f32.gmra.mxu0 %v566
        %v671 = vpop.f32.mrf.mxu0
        %v672 = vadd.f32 %v598, %v671
        %673 = vmatmul.f32.gmra.mxu0 %v567
        %v674 = vpop.f32.mrf.mxu0
        %v675 = vadd.f32 %v598, %v674
        %676 = vmatmul.f32.gmra.mxu0 %v568
        %v677 = vpop.f32.mrf.mxu0
        %v678 = vadd.f32 %v598, %v677
        %679 = vmatmul.f32.gmra.mxu0 %v569
        %v680 = vpop.f32.mrf.mxu0
        %v681 = vadd.f32 %v598, %v680
        %682 = vmatmul.f32.gmra.mxu0 %v570
        %v683 = vpop.f32.mrf.mxu0
        %v684 = vadd.f32 %v598, %v683
        %685 = vmatmul.f32.gmra.mxu0 %v571
        %v686 = vpop.f32.mrf.mxu0
        %v687 = vadd.f32 %v598, %v686
        %688 = vmatmul.f32.gmra.mxu0 %v572
        %v689 = vpop.f32.mrf.mxu0
        %v690 = vadd.f32 %v598, %v689
        %691 = vmatmul.f32.gmra.mxu0 %v573
        %v692 = vpop.f32.mrf.mxu0
        %v693 = vadd.f32 %v598, %v692
        %694 = vmatmul.f32.gmra.mxu0 %v574
        %v695 = vpop.f32.mrf.mxu0
        %v696 = vadd.f32 %v598, %v695
        %697 = vmatmul.f32.gmra.mxu0 %v575
        %v698 = vpop.f32.mrf.mxu0
        %v699 = vadd.f32 %v598, %v698
        %700 = vmatmul.f32.gmra.mxu0 %v576
        %v701 = vpop.f32.mrf.mxu0
        %v702 = vadd.f32 %v598, %v701
        %703 = vmatmul.f32.gmra.mxu0 %v577
        %v704 = vpop.f32.mrf.mxu0
        %v705 = vadd.f32 %v598, %v704
        %706 = vmatmul.f32.gmra.mxu0 %v578
        %v707 = vpop.f32.mrf.mxu0
        %v708 = vadd.f32 %v598, %v707
        %709 = vmatmul.f32.gmra.mxu0 %v579
        %v710 = vpop.f32.mrf.mxu0
        %v711 = vadd.f32 %v598, %v710
        %712 = vdwg.mxu0
        %v713 = vmax.f32 %v618, 0.0
        %v714 = vmax.f32 %v621, 0.0
        %v715 = vmax.f32 %v624, 0.0
        %v716 = vmax.f32 %v627, 0.0
        %v717 = vmax.f32 %v630, 0.0
        %v718 = vmax.f32 %v633, 0.0
        %v719 = vmax.f32 %v636, 0.0
        %v720 = vmax.f32 %v639, 0.0
        %v721 = vmax.f32 %v642, 0.0
        %v722 = vmax.f32 %v645, 0.0
        %v723 = vmax.f32 %v648, 0.0
        %v724 = vmax.f32 %v651, 0.0
        %v725 = vmax.f32 %v654, 0.0
        %v726 = vmax.f32 %v657, 0.0
        %v727 = vmax.f32 %v660, 0.0
        %v728 = vmax.f32 %v663, 0.0
        %v729 = vmax.f32 %v666, 0.0
        %v730 = vmax.f32 %v669, 0.0
        %v731 = vmax.f32 %v672, 0.0
        %v732 = vmax.f32 %v675, 0.0
        %v733 = vmax.f32 %v678, 0.0
        %v734 = vmax.f32 %v681, 0.0
        %v735 = vmax.f32 %v684, 0.0
        %v736 = vmax.f32 %v687, 0.0
        %v737 = vmax.f32 %v690, 0.0
        %v738 = vmax.f32 %v693, 0.0
        %v739 = vmax.f32 %v696, 0.0
        %v740 = vmax.f32 %v699, 0.0
        %v741 = vmax.f32 %v702, 0.0
        %v742 = vmax.f32 %v705, 0.0
        %v743 = vmax.f32 %v708, 0.0
        %v744 = vmax.f32 %v711, 0.0
        %v745 = vld [vmem:[#allocation2 + $0x8] sm:$0xff]
        %v746 = vld [vmem:[#allocation2 + $0x38] sm:$0xff]
        %v747 = vld [vmem:[#allocation2 + $0x68] sm:$0xff]
        %v748 = vld [vmem:[#allocation2 + $0x98] sm:$0xff]
        %v749 = vld [vmem:[#allocation2 + $0xc8] sm:$0xff]
        %v750 = vld [vmem:[#allocation2 + $0xf8] sm:$0xff]
        %v751 = vld [vmem:[#allocation2 + $0x128] sm:$0xff]
        %v752 = vld [vmem:[#allocation2 + $0x158] sm:$0xff]
        %v753 = vld [vmem:[#allocation2 + $0x188] sm:$0xff]
        %v754 = vld [vmem:[#allocation2 + $0x1b8] sm:$0xff]
        %v755 = vld [vmem:[#allocation2 + $0x1e8] sm:$0xff]
        %v756 = vld [vmem:[#allocation2 + $0x218] sm:$0xff]
        %v757 = vld [vmem:[#allocation2 + $0x248] sm:$0xff]
        %v758 = vld [vmem:[#allocation2 + $0x278] sm:$0xff]
        %v759 = vld [vmem:[#allocation2 + $0x2a8] sm:$0xff]
        %v760 = vld [vmem:[#allocation2 + $0x2d8] sm:$0xff]
        %v761 = vld [vmem:[%s4 + $0x1] sm:$0x1]
        %v763 = vperm.slane %v761, 0
        %765 = vmatpush.msra.mxu0 %v760
        %766 = vmatpush.msra.mxu0 %v759
        %767 = vmatpush.msra.mxu0 %v758
        %768 = vmatpush.msra.mxu0 %v757
        %769 = vmatpush.msra.mxu0 %v756
        %770 = vmatpush.msra.mxu0 %v755
        %771 = vmatpush.msra.mxu0 %v754
        %772 = vmatpush.msra.mxu0 %v753
        %773 = vmatpush.msra.mxu0 %v752
        %774 = vmatpush.msra.mxu0 %v751
        %775 = vmatpush.msra.mxu0 %v750
        %776 = vmatpush.msra.mxu0 %v749
        %777 = vmatpush.msra.mxu0 %v748
        %778 = vmatpush.msra.mxu0 %v747
        %779 = vmatpush.msra.mxu0 %v746
        %780 = vmatpush.msra.mxu0 %v745
        %781 = vmatmul.f32.gmra.mxu0 %v713
        %v782 = vpop.f32.mrf.mxu0
        %v783 = vadd.f32 %v763, %v782
        %784 = vmatmul.f32.gmra.mxu0 %v714
        %v785 = vpop.f32.mrf.mxu0
        %v786 = vadd.f32 %v763, %v785
        %787 = vmatmul.f32.gmra.mxu0 %v715
        %v788 = vpop.f32.mrf.mxu0
        %v789 = vadd.f32 %v763, %v788
        %790 = vmatmul.f32.gmra.mxu0 %v716
        %v791 = vpop.f32.mrf.mxu0
        %v792 = vadd.f32 %v763, %v791
        %793 = vmatmul.f32.gmra.mxu0 %v717
        %v794 = vpop.f32.mrf.mxu0
        %v795 = vadd.f32 %v763, %v794
        %796 = vmatmul.f32.gmra.mxu0 %v718
        %v797 = vpop.f32.mrf.mxu0
        %v798 = vadd.f32 %v763, %v797
        %799 = vmatmul.f32.gmra.mxu0 %v719
        %v800 = vpop.f32.mrf.mxu0
        %v801 = vadd.f32 %v763, %v800
        %802 = vmatmul.f32.gmra.mxu0 %v720
        %v803 = vpop.f32.mrf.mxu0
        %v804 = vadd.f32 %v763, %v803
        %805 = vmatmul.f32.gmra.mxu0 %v721
        %v806 = vpop.f32.mrf.mxu0
        %v807 = vadd.f32 %v763, %v806
        %808 = vmatmul.f32.gmra.mxu0 %v722
        %v809 = vpop.f32.mrf.mxu0
        %v810 = vadd.f32 %v763, %v809
        %811 = vmatmul.f32.gmra.mxu0 %v723
        %v812 = vpop.f32.mrf.mxu0
        %v813 = vadd.f32 %v763, %v812
        %814 = vmatmul.f32.gmra.mxu0 %v724
        %v815 = vpop.f32.mrf.mxu0
        %v816 = vadd.f32 %v763, %v815
        %817 = vmatmul.f32.gmra.mxu0 %v725
        %v818 = vpop.f32.mrf.mxu0
        %v819 = vadd.f32 %v763, %v818
        %820 = vmatmul.f32.gmra.mxu0 %v726
        %v821 = vpop.f32.mrf.mxu0
        %v822 = vadd.f32 %v763, %v821
        %823 = vmatmul.f32.gmra.mxu0 %v727
        %v824 = vpop.f32.mrf.mxu0
        %v825 = vadd.f32 %v763, %v824
        %826 = vmatmul.f32.gmra.mxu0 %v728
        %v827 = vpop.f32.mrf.mxu0
        %v828 = vadd.f32 %v763, %v827
        %829 = vmatmul.f32.gmra.mxu0 %v729
        %v830 = vpop.f32.mrf.mxu0
        %v831 = vadd.f32 %v763, %v830
        %832 = vmatmul.f32.gmra.mxu0 %v730
        %v833 = vpop.f32.mrf.mxu0
        %v834 = vadd.f32 %v763, %v833
        %835 = vmatmul.f32.gmra.mxu0 %v731
        %v836 = vpop.f32.mrf.mxu0
        %v837 = vadd.f32 %v763, %v836
        %838 = vmatmul.f32.gmra.mxu0 %v732
        %v839 = vpop.f32.mrf.mxu0
        %v840 = vadd.f32 %v763, %v839
        %841 = vmatmul.f32.gmra.mxu0 %v733
        %v842 = vpop.f32.mrf.mxu0
        %v843 = vadd.f32 %v763, %v842
        %844 = vmatmul.f32.gmra.mxu0 %v734
        %v845 = vpop.f32.mrf.mxu0
        %v846 = vadd.f32 %v763, %v845
        %847 = vmatmul.f32.gmra.mxu0 %v735
        %v848 = vpop.f32.mrf.mxu0
        %v849 = vadd.f32 %v763, %v848
        %850 = vmatmul.f32.gmra.mxu0 %v736
        %v851 = vpop.f32.mrf.mxu0
        %v852 = vadd.f32 %v763, %v851
        %853 = vmatmul.f32.gmra.mxu0 %v737
        %v854 = vpop.f32.mrf.mxu0
        %v855 = vadd.f32 %v763, %v854
        %856 = vmatmul.f32.gmra.mxu0 %v738
        %v857 = vpop.f32.mrf.mxu0
        %v858 = vadd.f32 %v763, %v857
        %859 = vmatmul.f32.gmra.mxu0 %v739
        %v860 = vpop.f32.mrf.mxu0
        %v861 = vadd.f32 %v763, %v860
        %862 = vmatmul.f32.gmra.mxu0 %v740
        %v863 = vpop.f32.mrf.mxu0
        %v864 = vadd.f32 %v763, %v863
        %865 = vmatmul.f32.gmra.mxu0 %v741
        %v866 = vpop.f32.mrf.mxu0
        %v867 = vadd.f32 %v763, %v866
        %868 = vmatmul.f32.gmra.mxu0 %v742
        %v869 = vpop.f32.mrf.mxu0
        %v870 = vadd.f32 %v763, %v869
        %871 = vmatmul.f32.gmra.mxu0 %v743
        %v872 = vpop.f32.mrf.mxu0
        %v873 = vadd.f32 %v763, %v872
        %874 = vmatmul.f32.gmra.mxu0 %v744
        %v875 = vpop.f32.mrf.mxu0
        %v876 = vadd.f32 %v763, %v875
        %877 = vdwg.mxu0
        %v878 = vmax.f32 %v783, 0.0
        %v879 = vmax.f32 %v786, 0.0
        %v880 = vmax.f32 %v789, 0.0
        %v881 = vmax.f32 %v792, 0.0
        %v882 = vmax.f32 %v795, 0.0
        %v883 = vmax.f32 %v798, 0.0
        %v884 = vmax.f32 %v801, 0.0
        %v885 = vmax.f32 %v804, 0.0
        %v886 = vmax.f32 %v807, 0.0
        %v887 = vmax.f32 %v810, 0.0
        %v888 = vmax.f32 %v813, 0.0
        %v889 = vmax.f32 %v816, 0.0
        %v890 = vmax.f32 %v819, 0.0
        %v891 = vmax.f32 %v822, 0.0
        %v892 = vmax.f32 %v825, 0.0
        %v893 = vmax.f32 %v828, 0.0
        %v894 = vmax.f32 %v831, 0.0
        %v895 = vmax.f32 %v834, 0.0
        %v896 = vmax.f32 %v837, 0.0
        %v897 = vmax.f32 %v840, 0.0
        %v898 = vmax.f32 %v843, 0.0
        %v899 = vmax.f32 %v846, 0.0
        %v900 = vmax.f32 %v849, 0.0
        %v901 = vmax.f32 %v852, 0.0
        %v902 = vmax.f32 %v855, 0.0
        %v903 = vmax.f32 %v858, 0.0
        %v904 = vmax.f32 %v861, 0.0
        %v905 = vmax.f32 %v864, 0.0
        %v906 = vmax.f32 %v867, 0.0
        %v907 = vmax.f32 %v870, 0.0
        %v908 = vmax.f32 %v873, 0.0
        %v909 = vmax.f32 %v876, 0.0
        %v910 = vld [vmem:[#allocation2 + $0x10] sm:$0xff]
        %v911 = vld [vmem:[#allocation2 + $0x40] sm:$0xff]
        %v912 = vld [vmem:[#allocation2 + $0x70] sm:$0xff]
        %v913 = vld [vmem:[#allocation2 + $0xa0] sm:$0xff]
        %v914 = vld [vmem:[#allocation2 + $0xd0] sm:$0xff]
        %v915 = vld [vmem:[#allocation2 + $0x100] sm:$0xff]
        %v916 = vld [vmem:[#allocation2 + $0x130] sm:$0xff]
        %v917 = vld [vmem:[#allocation2 + $0x160] sm:$0xff]
        %v918 = vld [vmem:[#allocation2 + $0x190] sm:$0xff]
        %v919 = vld [vmem:[#allocation2 + $0x1c0] sm:$0xff]
        %v920 = vld [vmem:[#allocation2 + $0x1f0] sm:$0xff]
        %v921 = vld [vmem:[#allocation2 + $0x220] sm:$0xff]
        %v922 = vld [vmem:[#allocation2 + $0x250] sm:$0xff]
        %v923 = vld [vmem:[#allocation2 + $0x280] sm:$0xff]
        %v924 = vld [vmem:[#allocation2 + $0x2b0] sm:$0xff]
        %v925 = vld [vmem:[#allocation2 + $0x2e0] sm:$0xff]
        %v926 = vld [vmem:[%s4 + $0x2] sm:$0x1]
        %v928 = vperm.slane %v926, 0
        %930 = vmatpush.msra.mxu0 %v925
        %931 = vmatpush.msra.mxu0 %v924
        %932 = vmatpush.msra.mxu0 %v923
        %933 = vmatpush.msra.mxu0 %v922
        %934 = vmatpush.msra.mxu0 %v921
        %935 = vmatpush.msra.mxu0 %v920
        %936 = vmatpush.msra.mxu0 %v919
        %937 = vmatpush.msra.mxu0 %v918
        %938 = vmatpush.msra.mxu0 %v917
        %939 = vmatpush.msra.mxu0 %v916
        %940 = vmatpush.msra.mxu0 %v915
        %941 = vmatpush.msra.mxu0 %v914
        %942 = vmatpush.msra.mxu0 %v913
        %943 = vmatpush.msra.mxu0 %v912
        %944 = vmatpush.msra.mxu0 %v911
        %945 = vmatpush.msra.mxu0 %v910
        %946 = vmatmul.f32.gmra.mxu0 %v878
        %v947 = vpop.f32.mrf.mxu0
        %v948 = vadd.f32 %v928, %v947
        %949 = vmatmul.f32.gmra.mxu0 %v879
        %v950 = vpop.f32.mrf.mxu0
        %v951 = vadd.f32 %v928, %v950
        %952 = vmatmul.f32.gmra.mxu0 %v880
        %v953 = vpop.f32.mrf.mxu0
        %v954 = vadd.f32 %v928, %v953
        %955 = vmatmul.f32.gmra.mxu0 %v881
        %v956 = vpop.f32.mrf.mxu0
        %v957 = vadd.f32 %v928, %v956
        %958 = vmatmul.f32.gmra.mxu0 %v882
        %v959 = vpop.f32.mrf.mxu0
        %v960 = vadd.f32 %v928, %v959
        %961 = vmatmul.f32.gmra.mxu0 %v883
        %v962 = vpop.f32.mrf.mxu0
        %v963 = vadd.f32 %v928, %v962
        %964 = vmatmul.f32.gmra.mxu0 %v884
        %v965 = vpop.f32.mrf.mxu0
        %v966 = vadd.f32 %v928, %v965
        %967 = vmatmul.f32.gmra.mxu0 %v885
        %v968 = vpop.f32.mrf.mxu0
        %v969 = vadd.f32 %v928, %v968
        %970 = vmatmul.f32.gmra.mxu0 %v886
        %v971 = vpop.f32.mrf.mxu0
        %v972 = vadd.f32 %v928, %v971
        %973 = vmatmul.f32.gmra.mxu0 %v887
        %v974 = vpop.f32.mrf.mxu0
        %v975 = vadd.f32 %v928, %v974
        %976 = vmatmul.f32.gmra.mxu0 %v888
        %v977 = vpop.f32.mrf.mxu0
        %v978 = vadd.f32 %v928, %v977
        %979 = vmatmul.f32.gmra.mxu0 %v889
        %v980 = vpop.f32.mrf.mxu0
        %v981 = vadd.f32 %v928, %v980
        %982 = vmatmul.f32.gmra.mxu0 %v890
        %v983 = vpop.f32.mrf.mxu0
        %v984 = vadd.f32 %v928, %v983
        %985 = vmatmul.f32.gmra.mxu0 %v891
        %v986 = vpop.f32.mrf.mxu0
        %v987 = vadd.f32 %v928, %v986
        %988 = vmatmul.f32.gmra.mxu0 %v892
        %v989 = vpop.f32.mrf.mxu0
        %v990 = vadd.f32 %v928, %v989
        %991 = vmatmul.f32.gmra.mxu0 %v893
        %v992 = vpop.f32.mrf.mxu0
        %v993 = vadd.f32 %v928, %v992
        %994 = vmatmul.f32.gmra.mxu0 %v894
        %v995 = vpop.f32.mrf.mxu0
        %v996 = vadd.f32 %v928, %v995
        %997 = vmatmul.f32.gmra.mxu0 %v895
        %v998 = vpop.f32.mrf.mxu0
        %v999 = vadd.f32 %v928, %v998
        %1000 = vmatmul.f32.gmra.mxu0 %v896
        %v1001 = vpop.f32.mrf.mxu0
        %v1002 = vadd.f32 %v928, %v1001
        %1003 = vmatmul.f32.gmra.mxu0 %v897
        %v1004 = vpop.f32.mrf.mxu0
        %v1005 = vadd.f32 %v928, %v1004
        %1006 = vmatmul.f32.gmra.mxu0 %v898
        %v1007 = vpop.f32.mrf.mxu0
        %v1008 = vadd.f32 %v928, %v1007
        %1009 = vmatmul.f32.gmra.mxu0 %v899
        %v1010 = vpop.f32.mrf.mxu0
        %v1011 = vadd.f32 %v928, %v1010
        %1012 = vmatmul.f32.gmra.mxu0 %v900
        %v1013 = vpop.f32.mrf.mxu0
        %v1014 = vadd.f32 %v928, %v1013
        %1015 = vmatmul.f32.gmra.mxu0 %v901
        %v1016 = vpop.f32.mrf.mxu0
        %v1017 = vadd.f32 %v928, %v1016
        %1018 = vmatmul.f32.gmra.mxu0 %v902
        %v1019 = vpop.f32.mrf.mxu0
        %v1020 = vadd.f32 %v928, %v1019
        %1021 = vmatmul.f32.gmra.mxu0 %v903
        %v1022 = vpop.f32.mrf.mxu0
        %v1023 = vadd.f32 %v928, %v1022
        %1024 = vmatmul.f32.gmra.mxu0 %v904
        %v1025 = vpop.f32.mrf.mxu0
        %v1026 = vadd.f32 %v928, %v1025
        %1027 = vmatmul.f32.gmra.mxu0 %v905
        %v1028 = vpop.f32.mrf.mxu0
        %v1029 = vadd.f32 %v928, %v1028
        %1030 = vmatmul.f32.gmra.mxu0 %v906
        %v1031 = vpop.f32.mrf.mxu0
        %v1032 = vadd.f32 %v928, %v1031
        %1033 = vmatmul.f32.gmra.mxu0 %v907
        %v1034 = vpop.f32.mrf.mxu0
        %v1035 = vadd.f32 %v928, %v1034
        %1036 = vmatmul.f32.gmra.mxu0 %v908
        %v1037 = vpop.f32.mrf.mxu0
        %v1038 = vadd.f32 %v928, %v1037
        %1039 = vmatmul.f32.gmra.mxu0 %v909
        %v1040 = vpop.f32.mrf.mxu0
        %v1041 = vadd.f32 %v928, %v1040
        %1042 = vdwg.mxu0
        %v1043 = vrot.slane %v948, 4
        %v1044 = vadd.f32 %v948, %v1043
        %v1045 = vrot.slane %v1044, 2
        %v1046 = vadd.f32 %v1044, %v1045
        %v1047 = vrot.slane %v1046, 1
        %v1048 = vadd.f32 %v1046, %v1047
        %v1049 = vrot.slane %v951, 4
        %v1050 = vadd.f32 %v951, %v1049
        %v1051 = vrot.slane %v1050, 2
        %v1052 = vadd.f32 %v1050, %v1051
        %v1053 = vrot.slane %v1052, 1
        %v1054 = vadd.f32 %v1052, %v1053
        %v1055 = vrot.slane %v954, 4
        %v1056 = vadd.f32 %v954, %v1055
        %v1057 = vrot.slane %v1056, 2
        %v1058 = vadd.f32 %v1056, %v1057
        %v1059 = vrot.slane %v1058, 1
        %v1060 = vadd.f32 %v1058, %v1059
        %v1061 = vrot.slane %v957, 4
        %v1062 = vadd.f32 %v957, %v1061
        %v1063 = vrot.slane %v1062, 2
        %v1064 = vadd.f32 %v1062, %v1063
        %v1065 = vrot.slane %v1064, 1
        %v1066 = vadd.f32 %v1064, %v1065
        %v1067 = vrot.slane %v960, 4
        %v1068 = vadd.f32 %v960, %v1067
        %v1069 = vrot.slane %v1068, 2
        %v1070 = vadd.f32 %v1068, %v1069
        %v1071 = vrot.slane %v1070, 1
        %v1072 = vadd.f32 %v1070, %v1071
        %v1073 = vrot.slane %v963, 4
        %v1074 = vadd.f32 %v963, %v1073
        %v1075 = vrot.slane %v1074, 2
        %v1076 = vadd.f32 %v1074, %v1075
        %v1077 = vrot.slane %v1076, 1
        %v1078 = vadd.f32 %v1076, %v1077
        %v1079 = vrot.slane %v966, 4
        %v1080 = vadd.f32 %v966, %v1079
        %v1081 = vrot.slane %v1080, 2
        %v1082 = vadd.f32 %v1080, %v1081
        %v1083 = vrot.slane %v1082, 1
        %v1084 = vadd.f32 %v1082, %v1083
        %v1085 = vrot.slane %v969, 4
        %v1086 = vadd.f32 %v969, %v1085
        %v1087 = vrot.slane %v1086, 2
        %v1088 = vadd.f32 %v1086, %v1087
        %v1089 = vrot.slane %v1088, 1
        %v1090 = vadd.f32 %v1088, %v1089
        %v1091 = vrot.slane %v972, 4
        %v1092 = vadd.f32 %v972, %v1091
        %v1093 = vrot.slane %v1092, 2
        %v1094 = vadd.f32 %v1092, %v1093
        %v1095 = vrot.slane %v1094, 1
        %v1096 = vadd.f32 %v1094, %v1095
        %v1097 = vrot.slane %v975, 4
        %v1098 = vadd.f32 %v975, %v1097
        %v1099 = vrot.slane %v1098, 2
        %v1100 = vadd.f32 %v1098, %v1099
        %v1101 = vrot.slane %v1100, 1
        %v1102 = vadd.f32 %v1100, %v1101
        %v1103 = vrot.slane %v978, 4
        %v1104 = vadd.f32 %v978, %v1103
        %v1105 = vrot.slane %v1104, 2
        %v1106 = vadd.f32 %v1104, %v1105
        %v1107 = vrot.slane %v1106, 1
        %v1108 = vadd.f32 %v1106, %v1107
        %v1109 = vrot.slane %v981, 4
        %v1110 = vadd.f32 %v981, %v1109
        %v1111 = vrot.slane %v1110, 2
        %v1112 = vadd.f32 %v1110, %v1111
        %v1113 = vrot.slane %v1112, 1
        %v1114 = vadd.f32 %v1112, %v1113
        %v1115 = vrot.slane %v984, 4
        %v1116 = vadd.f32 %v984, %v1115
        %v1117 = vrot.slane %v1116, 2
        %v1118 = vadd.f32 %v1116, %v1117
        %v1119 = vrot.slane %v1118, 1
        %v1120 = vadd.f32 %v1118, %v1119
        %v1121 = vrot.slane %v987, 4
        %v1122 = vadd.f32 %v987, %v1121
        %v1123 = vrot.slane %v1122, 2
        %v1124 = vadd.f32 %v1122, %v1123
        %v1125 = vrot.slane %v1124, 1
        %v1126 = vadd.f32 %v1124, %v1125
        %v1127 = vrot.slane %v990, 4
        %v1128 = vadd.f32 %v990, %v1127
        %v1129 = vrot.slane %v1128, 2
        %v1130 = vadd.f32 %v1128, %v1129
        %v1131 = vrot.slane %v1130, 1
        %v1132 = vadd.f32 %v1130, %v1131
        %v1133 = vrot.slane %v993, 4
        %v1134 = vadd.f32 %v993, %v1133
        %v1135 = vrot.slane %v1134, 2
        %v1136 = vadd.f32 %v1134, %v1135
        %v1137 = vrot.slane %v1136, 1
        %v1138 = vadd.f32 %v1136, %v1137
        %v1139 = vrot.slane %v996, 4
        %v1140 = vadd.f32 %v996, %v1139
        %v1141 = vrot.slane %v1140, 2
        %v1142 = vadd.f32 %v1140, %v1141
        %v1143 = vrot.slane %v1142, 1
        %v1144 = vadd.f32 %v1142, %v1143
        %v1145 = vrot.slane %v999, 4
        %v1146 = vadd.f32 %v999, %v1145
        %v1147 = vrot.slane %v1146, 2
        %v1148 = vadd.f32 %v1146, %v1147
        %v1149 = vrot.slane %v1148, 1
        %v1150 = vadd.f32 %v1148, %v1149
        %v1151 = vrot.slane %v1002, 4
        %v1152 = vadd.f32 %v1002, %v1151
        %v1153 = vrot.slane %v1152, 2
        %v1154 = vadd.f32 %v1152, %v1153
        %v1155 = vrot.slane %v1154, 1
        %v1156 = vadd.f32 %v1154, %v1155
        %v1157 = vrot.slane %v1005, 4
        %v1158 = vadd.f32 %v1005, %v1157
        %v1159 = vrot.slane %v1158, 2
        %v1160 = vadd.f32 %v1158, %v1159
        %v1161 = vrot.slane %v1160, 1
        %v1162 = vadd.f32 %v1160, %v1161
        %v1163 = vrot.slane %v1008, 4
        %v1164 = vadd.f32 %v1008, %v1163
        %v1165 = vrot.slane %v1164, 2
        %v1166 = vadd.f32 %v1164, %v1165
        %v1167 = vrot.slane %v1166, 1
        %v1168 = vadd.f32 %v1166, %v1167
        %v1169 = vrot.slane %v1011, 4
        %v1170 = vadd.f32 %v1011, %v1169
        %v1171 = vrot.slane %v1170, 2
        %v1172 = vadd.f32 %v1170, %v1171
        %v1173 = vrot.slane %v1172, 1
        %v1174 = vadd.f32 %v1172, %v1173
        %v1175 = vrot.slane %v1014, 4
        %v1176 = vadd.f32 %v1014, %v1175
        %v1177 = vrot.slane %v1176, 2
        %v1178 = vadd.f32 %v1176, %v1177
        %v1179 = vrot.slane %v1178, 1
        %v1180 = vadd.f32 %v1178, %v1179
        %v1181 = vrot.slane %v1017, 4
        %v1182 = vadd.f32 %v1017, %v1181
        %v1183 = vrot.slane %v1182, 2
        %v1184 = vadd.f32 %v1182, %v1183
        %v1185 = vrot.slane %v1184, 1
        %v1186 = vadd.f32 %v1184, %v1185
        %v1187 = vrot.slane %v1020, 4
        %v1188 = vadd.f32 %v1020, %v1187
        %v1189 = vrot.slane %v1188, 2
        %v1190 = vadd.f32 %v1188, %v1189
        %v1191 = vrot.slane %v1190, 1
        %v1192 = vadd.f32 %v1190, %v1191
        %v1193 = vrot.slane %v1023, 4
        %v1194 = vadd.f32 %v1023, %v1193
        %v1195 = vrot.slane %v1194, 2
        %v1196 = vadd.f32 %v1194, %v1195
        %v1197 = vrot.slane %v1196, 1
        %v1198 = vadd.f32 %v1196, %v1197
        %v1199 = vrot.slane %v1026, 4
        %v1200 = vadd.f32 %v1026, %v1199
        %v1201 = vrot.slane %v1200, 2
        %v1202 = vadd.f32 %v1200, %v1201
        %v1203 = vrot.slane %v1202, 1
        %v1204 = vadd.f32 %v1202, %v1203
        %v1205 = vrot.slane %v1029, 4
        %v1206 = vadd.f32 %v1029, %v1205
        %v1207 = vrot.slane %v1206, 2
        %v1208 = vadd.f32 %v1206, %v1207
        %v1209 = vrot.slane %v1208, 1
        %v1210 = vadd.f32 %v1208, %v1209
        %v1211 = vrot.slane %v1032, 4
        %v1212 = vadd.f32 %v1032, %v1211
        %v1213 = vrot.slane %v1212, 2
        %v1214 = vadd.f32 %v1212, %v1213
        %v1215 = vrot.slane %v1214, 1
        %v1216 = vadd.f32 %v1214, %v1215
        %v1217 = vrot.slane %v1035, 4
        %v1218 = vadd.f32 %v1035, %v1217
        %v1219 = vrot.slane %v1218, 2
        %v1220 = vadd.f32 %v1218, %v1219
        %v1221 = vrot.slane %v1220, 1
        %v1222 = vadd.f32 %v1220, %v1221
        %v1223 = vrot.slane %v1038, 4
        %v1224 = vadd.f32 %v1038, %v1223
        %v1225 = vrot.slane %v1224, 2
        %v1226 = vadd.f32 %v1224, %v1225
        %v1227 = vrot.slane %v1226, 1
        %v1228 = vadd.f32 %v1226, %v1227
        %v1229 = vrot.slane %v1041, 4
        %v1230 = vadd.f32 %v1041, %v1229
        %v1231 = vrot.slane %v1230, 2
        %v1232 = vadd.f32 %v1230, %v1231
        %v1233 = vrot.slane %v1232, 1
        %v1234 = vadd.f32 %v1232, %v1233
        %v1235 = vrcp.pop 8.0
        %v1236 = vmul.f32 8.0, %v1235
        %v1237 = vsub.f32 1.0, %v1236
        %v1238 = vmul.f32 %v1235, %v1237
        %v1239 = vadd.f32 %v1235, %v1238
        %vm1240 = vweird.f32 %v1235
        %v1241 = vsel %vm1240, %v1235, %v1239
        %v1242 = vmul.f32 %v1048, %v1241
        %v1243 = vmul.f32 %v1054, %v1241
        %v1244 = vmul.f32 %v1060, %v1241
        %v1245 = vmul.f32 %v1066, %v1241
        %v1246 = vmul.f32 %v1072, %v1241
        %v1247 = vmul.f32 %v1078, %v1241
        %v1248 = vmul.f32 %v1084, %v1241
        %v1249 = vmul.f32 %v1090, %v1241
        %v1250 = vmul.f32 %v1096, %v1241
        %v1251 = vmul.f32 %v1102, %v1241
        %v1252 = vmul.f32 %v1108, %v1241
        %v1253 = vmul.f32 %v1114, %v1241
        %v1254 = vmul.f32 %v1120, %v1241
        %v1255 = vmul.f32 %v1126, %v1241
        %v1256 = vmul.f32 %v1132, %v1241
        %v1257 = vmul.f32 %v1138, %v1241
        %v1258 = vmul.f32 %v1144, %v1241
        %v1259 = vmul.f32 %v1150, %v1241
        %v1260 = vmul.f32 %v1156, %v1241
        %v1261 = vmul.f32 %v1162, %v1241
        %v1262 = vmul.f32 %v1168, %v1241
        %v1263 = vmul.f32 %v1174, %v1241
        %v1264 = vmul.f32 %v1180, %v1241
        %v1265 = vmul.f32 %v1186, %v1241
        %v1266 = vmul.f32 %v1192, %v1241
        %v1267 = vmul.f32 %v1198, %v1241
        %v1268 = vmul.f32 %v1204, %v1241
        %v1269 = vmul.f32 %v1210, %v1241
        %v1270 = vmul.f32 %v1216, %v1241
        %v1271 = vmul.f32 %v1222, %v1241
        %v1272 = vmul.f32 %v1228, %v1241
        %v1273 = vmul.f32 %v1234, %v1241
        %v1274 = vld [vmem:[#allocation2 + $0x18] sm:$0xff]
        %v1275 = vld [vmem:[#allocation2 + $0x48] sm:$0xff]
        %v1276 = vld [vmem:[#allocation2 + $0x78] sm:$0xff]
        %v1277 = vld [vmem:[#allocation2 + $0xa8] sm:$0xff]
        %v1278 = vld [vmem:[#allocation2 + $0xd8] sm:$0xff]
        %v1279 = vld [vmem:[#allocation2 + $0x108] sm:$0xff]
        %v1280 = vld [vmem:[#allocation2 + $0x138] sm:$0xff]
        %v1281 = vld [vmem:[#allocation2 + $0x168] sm:$0xff]
        %v1282 = vld [vmem:[#allocation2 + $0x198] sm:$0xff]
        %v1283 = vld [vmem:[#allocation2 + $0x1c8] sm:$0xff]
        %v1284 = vld [vmem:[#allocation2 + $0x1f8] sm:$0xff]
        %v1285 = vld [vmem:[#allocation2 + $0x228] sm:$0xff]
        %v1286 = vld [vmem:[#allocation2 + $0x258] sm:$0xff]
        %v1287 = vld [vmem:[#allocation2 + $0x288] sm:$0xff]
        %v1288 = vld [vmem:[#allocation2 + $0x2b8] sm:$0xff]
        %v1289 = vld [vmem:[#allocation2 + $0x2e8] sm:$0xff]
        %v1290 = vld [vmem:[%s4 + $0x3] sm:$0x1]
        %v1292 = vperm.slane %v1290, 0
        %vm1326 = vcmask 1041409
        %v1327 = vsel %vm1326, %v1243, %v1242
        %vm1328 = vcmask 1042434
        %v1329 = vsel %vm1328, %v1244, %v1327
        %vm1330 = vcmask 1043459
        %v1331 = vsel %vm1330, %v1245, %v1329
        %vm1332 = vcmask 1044484
        %v1333 = vsel %vm1332, %v1246, %v1331
        %vm1334 = vcmask 1045509
        %v1335 = vsel %vm1334, %v1247, %v1333
        %vm1336 = vcmask 1046534
        %v1337 = vsel %vm1336, %v1248, %v1335
        %vm1338 = vcmask 1047559
        %v1339 = vsel %vm1338, %v1249, %v1337
        %v1340 = vsel %vm1326, %v1251, %v1250
        %v1341 = vsel %vm1328, %v1252, %v1340
        %v1342 = vsel %vm1330, %v1253, %v1341
        %v1343 = vsel %vm1332, %v1254, %v1342
        %v1344 = vsel %vm1334, %v1255, %v1343
        %v1345 = vsel %vm1336, %v1256, %v1344
        %v1346 = vsel %vm1338, %v1257, %v1345
        %v1347 = vsel %vm1326, %v1259, %v1258
        %v1348 = vsel %vm1328, %v1260, %v1347
        %v1349 = vsel %vm1330, %v1261, %v1348
        %v1350 = vsel %vm1332, %v1262, %v1349
        %v1351 = vsel %vm1334, %v1263, %v1350
        %v1352 = vsel %vm1336, %v1264, %v1351
        %v1353 = vsel %vm1338, %v1265, %v1352
        %v1354 = vsel %vm1326, %v1267, %v1266
        %v1355 = vsel %vm1328, %v1268, %v1354
        %v1356 = vsel %vm1330, %v1269, %v1355
        %v1357 = vsel %vm1332, %v1270, %v1356
        %v1358 = vsel %vm1334, %v1271, %v1357
        %v1359 = vsel %vm1336, %v1272, %v1358
        %v1360 = vsel %vm1338, %v1273, %v1359
        %1365 = vmatpush.msra.mxu0 %v1289
        %1366 = vmatpush.msra.mxu0 %v1288
        %1367 = vmatpush.msra.mxu0 %v1287
        %1368 = vmatpush.msra.mxu0 %v1286
        %1369 = vmatpush.msra.mxu0 %v1285
        %1370 = vmatpush.msra.mxu0 %v1284
        %1371 = vmatpush.msra.mxu0 %v1283
        %1372 = vmatpush.msra.mxu0 %v1282
        %1373 = vmatpush.msra.mxu0 %v1281
        %1374 = vmatpush.msra.mxu0 %v1280
        %1375 = vmatpush.msra.mxu0 %v1279
        %1376 = vmatpush.msra.mxu0 %v1278
        %1377 = vmatpush.msra.mxu0 %v1277
        %1378 = vmatpush.msra.mxu0 %v1276
        %1379 = vmatpush.msra.mxu0 %v1275
        %1380 = vmatpush.msra.mxu0 %v1274
        %1381 = vmatmul.f32.gmra.mxu0 %v1339
        %v1382 = vpop.f32.mrf.mxu0
        %v1383 = vadd.f32 %v1292, %v1382
        %1384 = vmatmul.f32.gmra.mxu0 %v1346
        %v1385 = vpop.f32.mrf.mxu0
        %v1386 = vadd.f32 %v1292, %v1385
        %1387 = vmatmul.f32.gmra.mxu0 %v1353
        %v1388 = vpop.f32.mrf.mxu0
        %v1389 = vadd.f32 %v1292, %v1388
        %1390 = vmatmul.f32.gmra.mxu0 %v1360
        %v1391 = vpop.f32.mrf.mxu0
        %v1392 = vadd.f32 %v1292, %v1391
        %1393 = vdwg.mxu0
        %v1394 = vmax.f32 %v1383, 0.0
        %v1395 = vmax.f32 %v1386, 0.0
        %v1396 = vmax.f32 %v1389, 0.0
        %v1397 = vmax.f32 %v1392, 0.0
        %v1398 = vld [vmem:[#allocation2 + $0x20] sm:$0xff]
        %v1399 = vld [vmem:[#allocation2 + $0x50] sm:$0xff]
        %v1400 = vld [vmem:[#allocation2 + $0x80] sm:$0xff]
        %v1401 = vld [vmem:[#allocation2 + $0xb0] sm:$0xff]
        %v1402 = vld [vmem:[#allocation2 + $0xe0] sm:$0xff]
        %v1403 = vld [vmem:[#allocation2 + $0x110] sm:$0xff]
        %v1404 = vld [vmem:[#allocation2 + $0x140] sm:$0xff]
        %v1405 = vld [vmem:[#allocation2 + $0x170] sm:$0xff]
        %v1406 = vld [vmem:[#allocation2 + $0x1a0] sm:$0xff]
        %v1407 = vld [vmem:[#allocation2 + $0x1d0] sm:$0xff]
        %v1408 = vld [vmem:[#allocation2 + $0x200] sm:$0xff]
        %v1409 = vld [vmem:[#allocation2 + $0x230] sm:$0xff]
        %v1410 = vld [vmem:[#allocation2 + $0x260] sm:$0xff]
        %v1411 = vld [vmem:[#allocation2 + $0x290] sm:$0xff]
        %v1412 = vld [vmem:[#allocation2 + $0x2c0] sm:$0xff]
        %v1413 = vld [vmem:[#allocation2 + $0x2f0] sm:$0xff]
        %v1414 = vld [vmem:[%s4 + $0x4] sm:$0x1]
        %v1416 = vperm.slane %v1414, 0
        %1418 = vmatpush.msra.mxu0 %v1413
        %1419 = vmatpush.msra.mxu0 %v1412
        %1420 = vmatpush.msra.mxu0 %v1411
        %1421 = vmatpush.msra.mxu0 %v1410
        %1422 = vmatpush.msra.mxu0 %v1409
        %1423 = vmatpush.msra.mxu0 %v1408
        %1424 = vmatpush.msra.mxu0 %v1407
        %1425 = vmatpush.msra.mxu0 %v1406
        %1426 = vmatpush.msra.mxu0 %v1405
        %1427 = vmatpush.msra.mxu0 %v1404
        %1428 = vmatpush.msra.mxu0 %v1403
        %1429 = vmatpush.msra.mxu0 %v1402
        %1430 = vmatpush.msra.mxu0 %v1401
        %1431 = vmatpush.msra.mxu0 %v1400
        %1432 = vmatpush.msra.mxu0 %v1399
        %1433 = vmatpush.msra.mxu0 %v1398
        %1434 = vmatmul.f32.gmra.mxu0 %v1394
        %v1435 = vpop.f32.mrf.mxu0
        %v1436 = vadd.f32 %v1416, %v1435
        %1437 = vmatmul.f32.gmra.mxu0 %v1395
        %v1438 = vpop.f32.mrf.mxu0
        %v1439 = vadd.f32 %v1416, %v1438
        %1440 = vmatmul.f32.gmra.mxu0 %v1396
        %v1441 = vpop.f32.mrf.mxu0
        %v1442 = vadd.f32 %v1416, %v1441
        %1443 = vmatmul.f32.gmra.mxu0 %v1397
        %v1444 = vpop.f32.mrf.mxu0
        %v1445 = vadd.f32 %v1416, %v1444
        %1446 = vdwg.mxu0
        %v1447 = vmax.f32 %v1436, 0.0
        %v1448 = vmax.f32 %v1439, 0.0
        %v1449 = vmax.f32 %v1442, 0.0
        %v1450 = vmax.f32 %v1445, 0.0
        %v1451 = vld [vmem:[#allocation2 + $0x28] sm:$0xff]
        %v1452 = vld [vmem:[#allocation2 + $0x58] sm:$0xff]
        %v1453 = vld [vmem:[#allocation2 + $0x88] sm:$0xff]
        %v1454 = vld [vmem:[#allocation2 + $0xb8] sm:$0xff]
        %v1455 = vld [vmem:[#allocation2 + $0xe8] sm:$0xff]
        %v1456 = vld [vmem:[#allocation2 + $0x118] sm:$0xff]
        %v1457 = vld [vmem:[#allocation2 + $0x148] sm:$0xff]
        %v1458 = vld [vmem:[#allocation2 + $0x178] sm:$0xff]
        %v1459 = vld [vmem:[#allocation2 + $0x1a8] sm:$0xff]
        %v1460 = vld [vmem:[#allocation2 + $0x1d8] sm:$0xff]
        %v1461 = vld [vmem:[#allocation2 + $0x208] sm:$0xff]
        %v1462 = vld [vmem:[#allocation2 + $0x238] sm:$0xff]
        %v1463 = vld [vmem:[#allocation2 + $0x268] sm:$0xff]
        %v1464 = vld [vmem:[#allocation2 + $0x298] sm:$0xff]
        %v1465 = vld [vmem:[#allocation2 + $0x2c8] sm:$0xff]
        %v1466 = vld [vmem:[#allocation2 + $0x2f8] sm:$0xff]
        %v1467 = vld [vmem:[%s4 + $0x5] sm:$0x1]
        %v1469 = vperm.slane %v1467, 0
        %1471 = vmatpush.msra.mxu0 %v1466
        %1472 = vmatpush.msra.mxu0 %v1465
        %1473 = vmatpush.msra.mxu0 %v1464
        %1474 = vmatpush.msra.mxu0 %v1463
        %1475 = vmatpush.msra.mxu0 %v1462
        %1476 = vmatpush.msra.mxu0 %v1461
        %1477 = vmatpush.msra.mxu0 %v1460
        %1478 = vmatpush.msra.mxu0 %v1459
        %1479 = vmatpush.msra.mxu0 %v1458
        %1480 = vmatpush.msra.mxu0 %v1457
        %1481 = vmatpush.msra.mxu0 %v1456
        %1482 = vmatpush.msra.mxu0 %v1455
        %1483 = vmatpush.msra.mxu0 %v1454
        %1484 = vmatpush.msra.mxu0 %v1453
        %1485 = vmatpush.msra.mxu0 %v1452
        %1486 = vmatpush.msra.mxu0 %v1451
        %1487 = vmatmul.f32.gmra.mxu0 %v1447
        %v1488 = vpop.f32.mrf.mxu0
        %v1489 = vadd.f32 %v1469, %v1488
        %1490 = vmatmul.f32.gmra.mxu0 %v1448
        %v1491 = vpop.f32.mrf.mxu0
        %v1492 = vadd.f32 %v1469, %v1491
        %1493 = vmatmul.f32.gmra.mxu0 %v1449
        %v1494 = vpop.f32.mrf.mxu0
        %v1495 = vadd.f32 %v1469, %v1494
        %1496 = vmatmul.f32.gmra.mxu0 %v1450
        %v1497 = vpop.f32.mrf.mxu0
        %v1498 = vadd.f32 %v1469, %v1497
        %1499 = vdwg.mxu0
        %v1500 = vmax.f32 %v1489, 0.0
        %v1501 = vmax.f32 %v1492, 0.0
        %v1502 = vmax.f32 %v1495, 0.0
        %v1503 = vmax.f32 %v1498, 0.0
        %v1504 = vld [vmem:[%s5] sm:$0xff]
        %v1505 = vld [vmem:[%s5 + $0x8] sm:$0xff]
        %v1506 = vld [vmem:[%s5 + $0x10] sm:$0xff]
        %v1507 = vld [vmem:[%s5 + $0x18] sm:$0xff]
        %v1508 = vld [vmem:[%s5 + $0x20] sm:$0xff]
        %v1509 = vld [vmem:[%s5 + $0x28] sm:$0xff]
        %v1510 = vld [vmem:[%s5 + $0x30] sm:$0xff]
        %v1511 = vld [vmem:[%s5 + $0x38] sm:$0xff]
        %v1512 = vld [vmem:[%s5 + $0x40] sm:$0xff]
        %v1513 = vld [vmem:[%s5 + $0x48] sm:$0xff]
        %v1514 = vld [vmem:[%s5 + $0x50] sm:$0xff]
        %v1515 = vld [vmem:[%s5 + $0x58] sm:$0xff]
        %v1516 = vld [vmem:[%s5 + $0x60] sm:$0xff]
        %v1517 = vld [vmem:[%s5 + $0x68] sm:$0xff]
        %v1518 = vld [vmem:[%s5 + $0x70] sm:$0xff]
        %v1519 = vld [vmem:[%s5 + $0x78] sm:$0xff]
        %v1520 = vld [vmem:[%s6] sm:$0x1]
        %v1522 = vperm.slane %v1520, 0
        %1524 = vmatpush.msra.mxu0 %v1519
        %1525 = vmatpush.msra.mxu0 %v1518
        %1526 = vmatpush.msra.mxu0 %v1517
        %1527 = vmatpush.msra.mxu0 %v1516
        %1528 = vmatpush.msra.mxu0 %v1515
        %1529 = vmatpush.msra.mxu0 %v1514
        %1530 = vmatpush.msra.mxu0 %v1513
        %1531 = vmatpush.msra.mxu0 %v1512
        %1532 = vmatpush.msra.mxu0 %v1511
        %1533 = vmatpush.msra.mxu0 %v1510
        %1534 = vmatpush.msra.mxu0 %v1509
        %1535 = vmatpush.msra.mxu0 %v1508
        %1536 = vmatpush.msra.mxu0 %v1507
        %1537 = vmatpush.msra.mxu0 %v1506
        %1538 = vmatpush.msra.mxu0 %v1505
        %1539 = vmatpush.msra.mxu0 %v1504
        %1540 = vmatmul.f32.gmra.mxu0 %v1500
        %v1541 = vpop.f32.mrf.mxu0
        %v1542 = vadd.f32 %v1522, %v1541
        %1543 = vmatmul.f32.gmra.mxu0 %v1501
        %v1544 = vpop.f32.mrf.mxu0
        %v1545 = vadd.f32 %v1522, %v1544
        %1546 = vmatmul.f32.gmra.mxu0 %v1502
        %v1547 = vpop.f32.mrf.mxu0
        %v1548 = vadd.f32 %v1522, %v1547
        %1549 = vmatmul.f32.gmra.mxu0 %v1503
        %v1550 = vpop.f32.mrf.mxu0
        %v1551 = vadd.f32 %v1522, %v1550
        %1552 = vdwg.mxu0
        %1553 = vst [vmem:[%s289] sm:$0xff] %v1542
        %1554 = vst [vmem:[%s289 + $0x8] sm:$0xff] %v1545
        %1555 = vst [vmem:[%s289 + $0x10] sm:$0xff] %v1548
        %1556 = vst [vmem:[%s289 + $0x18] sm:$0xff] %v1551
        %s1557 = sand.u32 %s182, 1
        %s1558 = scalar_lea.sflag [#allocation4], %s1557
        %s1559 = sand.u32 %s182, 1
        %s1560 = smul.addr %s1559, 32
        %s1561 = scalar_lea.vmem [#allocation5], %s1560
        // Predicated region
        $region53: #{tpu_custom_call.1} parent=47 // pred_check
          %p1562 = pneg %p192
        $region54: #{tpu_custom_call.1} parent=47 // pred_check_branch
          %1564 = sbr.rel (%p1562) target = $region56
        $region55: #{tpu_custom_call.1} parent=47 // pred_region
          %s1565 = smul.u32 4, %s22
          %1567 = vsyncadd %s1558, 0
          %s1568 = smul.addr %s1565, 8
          %s1569 = scalar_lea.hbm %s7, %s1568
          %s1570 = sshll.u32 %s1561, 4
          %s1571 = int_to_ptr.vmem [resolvable:$true] %s1570
          %s1572 = sshll.u32 %s1569, 4
          %s1573 = int_to_ptr.hbm [resolvable:$true] %s1572
          %1578 = dma.vmem_to_hbm [thread:$0]  %s1571, 512, %s1573, %s1558, 128, 128, 8
        $region56: #{tpu_custom_call.1} parent=47 // pred_fallthru
          _
      $region48: #{tpu_custom_call.1} parent=5 // pred_fallthru
        _
      %p1579 = scmp.le.s32.totalorder 2, %s17
      // Predicated region
      $region57: #{tpu_custom_call.1} parent=5 // pred_check
        %p1580 = pneg %p1579
      $region58: #{tpu_custom_call.1} parent=5 // pred_check_branch
        %1582 = sbr.rel (%p1580) target = $region60
      $region59: #{tpu_custom_call.1} parent=5 // pred_region
        %s1583 = ssub.s32 %s17, 2
        // Predicated region
        $region61: #{tpu_custom_call.1} parent=59 // pred_check
          %p1584 = pneg %p198
        $region62: #{tpu_custom_call.1} parent=59 // pred_check_branch
          %1586 = sbr.rel (%p1584) target = $region64
        $region63: #{tpu_custom_call.1} parent=59 // pred_region
          %s1587 = sand.u32 %s183, 1
          %s1588 = scalar_lea.sflag [#allocation4], %s1587
          %s1589 = sand.u32 %s183, 1
          %s1590 = smul.addr %s1589, 32
          %s1591 = scalar_lea.vmem [#allocation5], %s1590
          %1593 = dma.done %s1588, 512
        $region64: #{tpu_custom_call.1} parent=59 // pred_fallthru
          _
      $region60: #{tpu_custom_call.1} parent=5 // pred_fallthru
        _
    $region6: #{tpu_custom_call.1} parent=1 // loop_footer
      %s21 = sadd.s32 1, %s17
    $region7: #{tpu_custom_call.1} parent=1 // loop_footer_branch
      %16 = sbr.rel target = $region3
    $region8: #{tpu_custom_call.1} parent=1 // loop_exit
      _
    %1594 = vsyncpa [#allocation3], 1
    %s1595 = scalar_lea.sflag [#allocation3], 1
    %1596 = vsyncpa %s1595, 1
    %1597 = vsyncpa [#allocation4], 1
    %s1598 = scalar_lea.sflag [#allocation4], 1
    %1599 = vsyncpa %s1598, 1

</llo_original>
